<compile_context>
chip_gen: v7x
topology: tpu7x:2x2x1
jax: 0.10.0
libtpu: 0.0.40
codegen_flags: <defaults>
</compile_context>

<pallas_src>
import jax
import jax.numpy as jnp
from jax.experimental import pallas as pl
from jax.experimental.pallas import tpu as pltpu


OUT_LANES = 128  # lane-dense padding for the output / slab width


def compute_slab_layout(F, latent, G, S):
    """Row offsets (multiples of 8) of each parameter section in the slab."""
    def up8(v):
        return ((v + 7) // 8) * 8
    o_enc = 0
    o_msg = up8(o_enc + F)
    o_mlp = up8(o_msg + latent)
    o_out = up8(o_mlp + latent)
    o_bias = up8(o_out + latent)
    o_p = up8(o_bias + 4)
    rows = up8(o_p + G * G * S)
    return dict(o_enc=o_enc, o_msg=o_msg, o_mlp=o_mlp, o_out=o_out,
                o_bias=o_bias, o_p=o_p, rows=rows)


def pack_params(raw_params, p_agg, layout, *, G, F, latent, d_r):
    """One-time parameter prep: pack everything constant into one (R,128) slab."""
    w_enc, b_enc, w_msg, b_msg, w_mlp, b_mlp, w_out, b_out = raw_params
    S, N = p_agg.shape
    GS = G * S
    slab = jnp.zeros((layout["rows"], OUT_LANES), jnp.float32)
    slab = slab.at[layout["o_enc"]:layout["o_enc"] + F, :latent].set(w_enc)
    # Ring degree (self + 2 neighbors = 3) folded into the message weights.
    slab = slab.at[layout["o_msg"]:layout["o_msg"] + latent, :latent].set(w_msg / 3.0)
    slab = slab.at[layout["o_mlp"]:layout["o_mlp"] + latent, :latent].set(w_mlp)
    slab = slab.at[layout["o_out"]:layout["o_out"] + latent, :d_r].set(w_out)
    ob = layout["o_bias"]
    slab = slab.at[ob + 0, :latent].set(b_enc[0])
    slab = slab.at[ob + 1, :latent].set(b_msg[0])
    slab = slab.at[ob + 2, :latent].set(b_mlp[0])
    slab = slab.at[ob + 3, :d_r].set(b_out[0])
    # Block-diagonal aggregation chunks: chunk g is (G*S, N); its rows
    # [g*S, (g+1)*S) carry p_agg (time-mean then subtask-mean, rows sum to 1).
    op = layout["o_p"]
    for g in range(G):
        r0 = op + g * GS + g * S
        slab = slab.at[r0:r0 + S, :N].set(p_agg)
    return slab


def make_cnp_encoder_kernel(layout, *, G, S, N, F, latent):
    GS = G * S
    o_enc, o_msg, o_mlp = layout["o_enc"], layout["o_msg"], layout["o_mlp"]
    o_out, o_bias, o_p = layout["o_out"], layout["o_bias"], layout["o_p"]

    def kernel(x_ref, slab_ref, r_ref):
        f32 = jnp.float32
        # Static sub-block loads out of the resident parameter slab.
        w_enc = slab_ref[o_enc:o_enc + F, 0:latent]          # (F, latent)
        w_msg = slab_ref[o_msg:o_msg + latent, 0:latent]     # (latent, latent), 1/3 folded
        w_mlp = slab_ref[o_mlp:o_mlp + latent, 0:latent]     # (latent, latent)
        w_out = slab_ref[o_out:o_out + latent, :]            # (latent, 128), zero-padded
        b_enc = slab_ref[o_bias + 0:o_bias + 1, 0:latent]
        b_msg = slab_ref[o_bias + 1:o_bias + 2, 0:latent]
        b_mlp = slab_ref[o_bias + 2:o_bias + 3, 0:latent]
        b_out = slab_ref[o_bias + 3:o_bias + 4, :]

        # --- node encoder + ring-stencil neighbor mean, per instance ---
        parts = []
        for g in range(G):
            xg = x_ref[g]                                              # (N, F)
            hg = jnp.dot(xg, w_enc, preferred_element_type=f32) + b_enc
            hg = jnp.maximum(hg, 0.0)
            # (self + prev + next) via XLU rolls; sequential accumulation to
            # cap live vreg copies.  1/3 is folded into w_msg.
            mg = hg + pltpu.roll(hg, 1, 0)
            mg = mg + pltpu.roll(hg, N - 1, 0)
            parts.append(mg)
        m = jnp.concatenate(parts, axis=0)                             # (G*N, latent)

        # --- message linear + output-MLP hidden layer (all instances at once) ---
        h = jnp.dot(m, w_msg, preferred_element_type=f32) + b_msg
        h = jnp.maximum(h, 0.0)
        h = jnp.dot(h, w_mlp, preferred_element_type=f32) + b_mlp
        h = jnp.maximum(h, 0.0)

        # --- aggregate (time-mean then subtask-mean) via block-diag chunks ---
        z = None
        for g in range(G):
            pg = slab_ref[o_p + g * GS:o_p + (g + 1) * GS, 0:N]        # (GS, N)
            zg = jnp.dot(pg, h[g * N:(g + 1) * N, :],
                         preferred_element_type=f32)                   # (GS, latent)
            z = zg if z is None else z + zg

        # --- tiny output linear, lane-dense (GS, 128) store ---
        r = jnp.dot(z, w_out, preferred_element_type=f32) + b_out
        r_ref[...] = r.astype(r_ref.dtype)

    return kernel


def cnp_encoder_forward(x_aug_b, slab, layout, *, G, S, d_r, latent):
    """x_aug_b: (B, N, F) batched preprocessed contexts; slab: packed params."""
    B, N, F = x_aug_b.shape
    assert B % G == 0
    R, lanes = slab.shape
    kernel = make_cnp_encoder_kernel(layout, G=G, S=S, N=N, F=F, latent=latent)

    r_pad = pl.pallas_call(
        kernel,
        out_shape=jax.ShapeDtypeStruct((B * S, lanes), jnp.float32),
        grid=(B // G,),
        in_specs=[
            pl.BlockSpec((G, N, F), lambda i: (i, 0, 0)),   # per-group context block
            pl.BlockSpec((R, lanes), lambda i: (0, 0)),     # resident parameter slab
        ],
        out_specs=pl.BlockSpec((G * S, lanes), lambda i: (i, 0)),
        compiler_params=pltpu.CompilerParams(
            dimension_semantics=("parallel",)),
    )(x_aug_b, slab)
    return r_pad[:, :d_r].reshape(B, S, d_r)


def reference_forward(x_aug, a_norm, raw_params, p_time, p_task):
    (w_enc, b_enc, w_msg, b_msg, w_mlp, b_mlp, w_out, b_out) = raw_params
    h = jnp.maximum(x_aug @ w_enc + b_enc, 0.0)
    h = jnp.maximum((a_norm @ h) @ w_msg + b_msg, 0.0)
    h = jnp.maximum(h @ w_mlp + b_mlp, 0.0)
    r_n = h @ w_out + b_out
    r_t = p_time @ r_n
    return p_task @ r_t


if __name__ == "__main__":
    key = jax.random.PRNGKey(0)

    # ---- small synthetic shapes consistent with the module ----
    x_dim = 8                 # raw node feature dim
    y_dim = 4                 # label dim (concatenated in preprocess)
    F = x_dim + y_dim
    latent = 32               # gnn_config.latent_dimension
    d_r = 16                  # encoder_config.d_r
    mesh_nodes_per_time = 16  # task_belonging[MESH_NODES_PER_TIME][0]
    time_steps_per_subtask = (3, 5)
    T = sum(time_steps_per_subtask)          # 8 time steps per context
    S = len(time_steps_per_subtask)          # 2 subtasks per context
    N = T * mesh_nodes_per_time              # 128 mesh nodes per context
    B = 8                                    # batch of context graphs
    G = 4                                    # contexts per grid step (8 output rows)

    keys = jax.random.split(key, 12)
    x = jax.random.normal(keys[0], (B, N, x_dim), dtype=jnp.float32)
    y = jax.random.normal(keys[1], (B, N, y_dim), dtype=jnp.float32)

    # preprocess_context_batch: all nodes are mesh nodes here, so expanded_y == y.
    x_aug = jnp.concatenate([x, y], axis=-1)                      # (B, N, F)

    # Row-normalized ring adjacency with self loops (reference path only; the
    # kernel implements the same stencil with XLU rolls + folded 1/3).
    idx = jnp.arange(N)
    a = (jnp.zeros((N, N), jnp.float32)
         .at[idx, idx].set(1.0)
         .at[idx, (idx + 1) % N].set(1.0)
         .at[idx, (idx - 1) % N].set(1.0))
    a_norm = a / jnp.sum(a, axis=1, keepdims=True)

    # Deterministic parameter init (synthetic weights, not a checkpoint).
    def init(k, shape, scale):
        return scale * jax.random.normal(k, shape, dtype=jnp.float32)

    w_enc = init(keys[2], (F, latent), 0.2)
    b_enc = init(keys[6], (1, latent), 0.1)
    w_msg = init(keys[3], (latent, latent), 0.2)
    b_msg = init(keys[7], (1, latent), 0.1)
    w_mlp = init(keys[4], (latent, latent), 0.2)
    b_mlp = init(keys[8], (1, latent), 0.1)
    w_out = init(keys[5], (latent, d_r), 0.2)
    b_out = init(keys[9], (1, d_r), 0.1)
    raw_params = (w_enc, b_enc, w_msg, b_msg, w_mlp, b_mlp, w_out, b_out)

    # P_time: mean over the mesh_nodes_per_time consecutive nodes of each step.
    t_of_node = jnp.repeat(jnp.arange(T), mesh_nodes_per_time)
    p_time = (jnp.arange(T)[:, None] == t_of_node[None, :]).astype(jnp.float32)
    p_time = p_time / mesh_nodes_per_time                          # (T, N)

    # P_task: scatter-mean over time steps belonging to each subtask.
    task_of_t = jnp.repeat(jnp.arange(S), jnp.array(time_steps_per_subtask))
    p_task = (jnp.arange(S)[:, None] == task_of_t[None, :]).astype(jnp.float32)
    p_task = p_task / jnp.sum(p_task, axis=1, keepdims=True)       # (S, T)

    # Fold both averaging steps into one static projection (rows sum to 1).
    p_agg = p_task @ p_time                                        # (S, N)

    # One-time parameter packing into a single (R, 128) slab.
    layout = compute_slab_layout(F, latent, G, S)
    slab = pack_params(raw_params, p_agg, layout, G=G, F=F, latent=latent, d_r=d_r)

    r = cnp_encoder_forward(x_aug, slab, layout, G=G, S=S, d_r=d_r, latent=latent)
    r = jax.block_until_ready(r)

    r_ref = jax.vmap(
        lambda xa: reference_forward(xa, a_norm, raw_params, p_time, p_task))(x_aug)

    assert r.shape == (B, S, d_r)
    assert jnp.allclose(r, r_ref, atol=1e-4, rtol=1e-4)
    print("KERNEL_OK")
</pallas_src>

<mosaic_0001>
module attributes {stable_mosaic.version = 11 : i64} {
  func.func @kernel(%arg0: i32, %arg1: memref<4x128x12xf32, #tpu.memory_space<vmem>>, %arg2: memref<152x128xf32, #tpu.memory_space<vmem>>, %arg3: memref<8x128xf32, #tpu.memory_space<vmem>>) attributes {dimension_semantics = [#tpu.dimension_semantics<parallel>], iteration_bounds = array<i64: 2>, scalar_prefetch = 0 : i64, scratch_operands = 0 : i64, tpu.core_type = #tpu.core_type<tc>, window_params = [{transform_indices = @transform_0, window_bounds = array<i64: 4, 128, 12>}, {pipeline_mode = #tpu.pipeline_mode<synchronous>, transform_indices = @transform_1, window_bounds = array<i64: 152, 128>}, {transform_indices = @transform_2, window_bounds = array<i64: 8, 128>}]} {
    %c0 = arith.constant 0 : index
    %c0_0 = arith.constant 0 : index
    %0 = vector.load %arg2[%c0, %c0_0] : memref<152x128xf32, #tpu.memory_space<vmem>>, vector<12x32xf32>
    %c16 = arith.constant 16 : index
    %c0_1 = arith.constant 0 : index
    %1 = vector.load %arg2[%c16, %c0_1] : memref<152x128xf32, #tpu.memory_space<vmem>>, vector<32x32xf32>
    %c48 = arith.constant 48 : index
    %c0_2 = arith.constant 0 : index
    %2 = vector.load %arg2[%c48, %c0_2] : memref<152x128xf32, #tpu.memory_space<vmem>>, vector<32x32xf32>
    %c80 = arith.constant 80 : index
    %c0_3 = arith.constant 0 : index
    %3 = vector.load %arg2[%c80, %c0_3] : memref<152x128xf32, #tpu.memory_space<vmem>>, vector<32x128xf32>
    %c112 = arith.constant 112 : index
    %c0_4 = arith.constant 0 : index
    %4 = vector.load %arg2[%c112, %c0_4] : memref<152x128xf32, #tpu.memory_space<vmem>>, vector<1x32xf32>
    %c113 = arith.constant 113 : index
    %c0_5 = arith.constant 0 : index
    %5 = vector.load %arg2[%c113, %c0_5] : memref<152x128xf32, #tpu.memory_space<vmem>>, vector<1x32xf32>
    %c114 = arith.constant 114 : index
    %c0_6 = arith.constant 0 : index
    %6 = vector.load %arg2[%c114, %c0_6] : memref<152x128xf32, #tpu.memory_space<vmem>>, vector<1x32xf32>
    %c115 = arith.constant 115 : index
    %c0_7 = arith.constant 0 : index
    %7 = vector.load %arg2[%c115, %c0_7] : memref<152x128xf32, #tpu.memory_space<vmem>>, vector<1x128xf32>
    %c0_8 = arith.constant 0 : index
    %c0_9 = arith.constant 0 : index
    %c0_10 = arith.constant 0 : index
    %8 = vector.load %arg1[%c0_8, %c0_9, %c0_10] : memref<4x128x12xf32, #tpu.memory_space<vmem>>, vector<1x128x12xf32>
    %9 = vector.shape_cast %8 : vector<1x128x12xf32> to vector<128x12xf32>
    %cst = arith.constant dense<0.000000e+00> : vector<128x32xf32>
    %10 = tpu.matmul %9, %0, %cst {dimension_numbers = #tpu.dot_dimension_numbers<[1], [0], [0], [1], [0, 0, 1, 1], [], []>} : vector<128x12xf32>, vector<12x32xf32>, vector<128x32xf32> -> vector<128x32xf32>
    %11 = vector.broadcast %4 : vector<1x32xf32> to vector<128x32xf32>
    %12 = arith.addf %10, %11 : vector<128x32xf32>
    %cst_11 = arith.constant 0.000000e+00 : f32
    %13 = vector.broadcast %cst_11 : f32 to vector<128x32xf32>
    %14 = arith.maximumf %12, %13 : vector<128x32xf32>
    %c1_i32 = arith.constant 1 : i32
    %15 = tpu.dynamic_rotate %14 by %c1_i32 dim 0 : vector<128x32xf32>, i32 -> vector<128x32xf32>
    %16 = arith.addf %14, %15 : vector<128x32xf32>
    %c127_i32 = arith.constant 127 : i32
    %17 = tpu.dynamic_rotate %14 by %c127_i32 dim 0 : vector<128x32xf32>, i32 -> vector<128x32xf32>
    %18 = arith.addf %16, %17 : vector<128x32xf32>
    %c1 = arith.constant 1 : index
    %c0_12 = arith.constant 0 : index
    %c0_13 = arith.constant 0 : index
    %19 = vector.load %arg1[%c1, %c0_12, %c0_13] : memref<4x128x12xf32, #tpu.memory_space<vmem>>, vector<1x128x12xf32>
    %20 = vector.shape_cast %19 : vector<1x128x12xf32> to vector<128x12xf32>
    %cst_14 = arith.constant dense<0.000000e+00> : vector<128x32xf32>
    %21 = tpu.matmul %20, %0, %cst_14 {dimension_numbers = #tpu.dot_dimension_numbers<[1], [0], [0], [1], [0, 0, 1, 1], [], []>} : vector<128x12xf32>, vector<12x32xf32>, vector<128x32xf32> -> vector<128x32xf32>
    %22 = vector.broadcast %4 : vector<1x32xf32> to vector<128x32xf32>
    %23 = arith.addf %21, %22 : vector<128x32xf32>
    %cst_15 = arith.constant 0.000000e+00 : f32
    %24 = vector.broadcast %cst_15 : f32 to vector<128x32xf32>
    %25 = arith.maximumf %23, %24 : vector<128x32xf32>
    %c1_i32_16 = arith.constant 1 : i32
    %26 = tpu.dynamic_rotate %25 by %c1_i32_16 dim 0 : vector<128x32xf32>, i32 -> vector<128x32xf32>
    %27 = arith.addf %25, %26 : vector<128x32xf32>
    %c127_i32_17 = arith.constant 127 : i32
    %28 = tpu.dynamic_rotate %25 by %c127_i32_17 dim 0 : vector<128x32xf32>, i32 -> vector<128x32xf32>
    %29 = arith.addf %27, %28 : vector<128x32xf32>
    %c2 = arith.constant 2 : index
    %c0_18 = arith.constant 0 : index
    %c0_19 = arith.constant 0 : index
    %30 = vector.load %arg1[%c2, %c0_18, %c0_19] : memref<4x128x12xf32, #tpu.memory_space<vmem>>, vector<1x128x12xf32>
    %31 = vector.shape_cast %30 : vector<1x128x12xf32> to vector<128x12xf32>
    %cst_20 = arith.constant dense<0.000000e+00> : vector<128x32xf32>
    %32 = tpu.matmul %31, %0, %cst_20 {dimension_numbers = #tpu.dot_dimension_numbers<[1], [0], [0], [1], [0, 0, 1, 1], [], []>} : vector<128x12xf32>, vector<12x32xf32>, vector<128x32xf32> -> vector<128x32xf32>
    %33 = vector.broadcast %4 : vector<1x32xf32> to vector<128x32xf32>
    %34 = arith.addf %32, %33 : vector<128x32xf32>
    %cst_21 = arith.constant 0.000000e+00 : f32
    %35 = vector.broadcast %cst_21 : f32 to vector<128x32xf32>
    %36 = arith.maximumf %34, %35 : vector<128x32xf32>
    %c1_i32_22 = arith.constant 1 : i32
    %37 = tpu.dynamic_rotate %36 by %c1_i32_22 dim 0 : vector<128x32xf32>, i32 -> vector<128x32xf32>
    %38 = arith.addf %36, %37 : vector<128x32xf32>
    %c127_i32_23 = arith.constant 127 : i32
    %39 = tpu.dynamic_rotate %36 by %c127_i32_23 dim 0 : vector<128x32xf32>, i32 -> vector<128x32xf32>
    %40 = arith.addf %38, %39 : vector<128x32xf32>
    %c3 = arith.constant 3 : index
    %c0_24 = arith.constant 0 : index
    %c0_25 = arith.constant 0 : index
    %41 = vector.load %arg1[%c3, %c0_24, %c0_25] : memref<4x128x12xf32, #tpu.memory_space<vmem>>, vector<1x128x12xf32>
    %42 = vector.shape_cast %41 : vector<1x128x12xf32> to vector<128x12xf32>
    %cst_26 = arith.constant dense<0.000000e+00> : vector<128x32xf32>
    %43 = tpu.matmul %42, %0, %cst_26 {dimension_numbers = #tpu.dot_dimension_numbers<[1], [0], [0], [1], [0, 0, 1, 1], [], []>} : vector<128x12xf32>, vector<12x32xf32>, vector<128x32xf32> -> vector<128x32xf32>
    %44 = vector.broadcast %4 : vector<1x32xf32> to vector<128x32xf32>
    %45 = arith.addf %43, %44 : vector<128x32xf32>
    %cst_27 = arith.constant 0.000000e+00 : f32
    %46 = vector.broadcast %cst_27 : f32 to vector<128x32xf32>
    %47 = arith.maximumf %45, %46 : vector<128x32xf32>
    %c1_i32_28 = arith.constant 1 : i32
    %48 = tpu.dynamic_rotate %47 by %c1_i32_28 dim 0 : vector<128x32xf32>, i32 -> vector<128x32xf32>
    %49 = arith.addf %47, %48 : vector<128x32xf32>
    %c127_i32_29 = arith.constant 127 : i32
    %50 = tpu.dynamic_rotate %47 by %c127_i32_29 dim 0 : vector<128x32xf32>, i32 -> vector<128x32xf32>
    %51 = arith.addf %49, %50 : vector<128x32xf32>
    %52 = tpu.concatenate %18, %29, %40, %51 in 0 : vector<128x32xf32>, vector<128x32xf32>, vector<128x32xf32>, vector<128x32xf32> -> vector<512x32xf32>
    %cst_30 = arith.constant dense<0.000000e+00> : vector<512x32xf32>
    %53 = tpu.matmul %52, %1, %cst_30 {dimension_numbers = #tpu.dot_dimension_numbers<[1], [0], [0], [1], [0, 0, 1, 1], [], []>} : vector<512x32xf32>, vector<32x32xf32>, vector<512x32xf32> -> vector<512x32xf32>
    %54 = vector.broadcast %5 : vector<1x32xf32> to vector<512x32xf32>
    %55 = arith.addf %53, %54 : vector<512x32xf32>
    %cst_31 = arith.constant 0.000000e+00 : f32
    %56 = vector.broadcast %cst_31 : f32 to vector<512x32xf32>
    %57 = arith.maximumf %55, %56 : vector<512x32xf32>
    %cst_32 = arith.constant dense<0.000000e+00> : vector<512x32xf32>
    %58 = tpu.matmul %57, %2, %cst_32 {dimension_numbers = #tpu.dot_dimension_numbers<[1], [0], [0], [1], [0, 0, 1, 1], [], []>} : vector<512x32xf32>, vector<32x32xf32>, vector<512x32xf32> -> vector<512x32xf32>
    %59 = vector.broadcast %6 : vector<1x32xf32> to vector<512x32xf32>
    %60 = arith.addf %58, %59 : vector<512x32xf32>
    %cst_33 = arith.constant 0.000000e+00 : f32
    %61 = vector.broadcast %cst_33 : f32 to vector<512x32xf32>
    %62 = arith.maximumf %60, %61 : vector<512x32xf32>
    %c120 = arith.constant 120 : index
    %c0_34 = arith.constant 0 : index
    %63 = vector.load %arg2[%c120, %c0_34] : memref<152x128xf32, #tpu.memory_space<vmem>>, vector<8x128xf32>
    %64 = vector.extract_strided_slice %62 {offsets = [0, 0], sizes = [128, 32], strides = [1, 1]} : vector<512x32xf32> to vector<128x32xf32>
    %cst_35 = arith.constant dense<0.000000e+00> : vector<8x32xf32>
    %65 = tpu.matmul %63, %64, %cst_35 {dimension_numbers = #tpu.dot_dimension_numbers<[1], [0], [0], [1], [0, 0, 1, 1], [], []>} : vector<8x128xf32>, vector<128x32xf32>, vector<8x32xf32> -> vector<8x32xf32>
    %c128 = arith.constant 128 : index
    %c0_36 = arith.constant 0 : index
    %66 = vector.load %arg2[%c128, %c0_36] : memref<152x128xf32, #tpu.memory_space<vmem>>, vector<8x128xf32>
    %67 = vector.extract_strided_slice %62 {offsets = [128, 0], sizes = [128, 32], strides = [1, 1]} : vector<512x32xf32> to vector<128x32xf32>
    %cst_37 = arith.constant dense<0.000000e+00> : vector<8x32xf32>
    %68 = tpu.matmul %66, %67, %cst_37 {dimension_numbers = #tpu.dot_dimension_numbers<[1], [0], [0], [1], [0, 0, 1, 1], [], []>} : vector<8x128xf32>, vector<128x32xf32>, vector<8x32xf32> -> vector<8x32xf32>
    %69 = arith.addf %65, %68 : vector<8x32xf32>
    %c136 = arith.constant 136 : index
    %c0_38 = arith.constant 0 : index
    %70 = vector.load %arg2[%c136, %c0_38] : memref<152x128xf32, #tpu.memory_space<vmem>>, vector<8x128xf32>
    %71 = vector.extract_strided_slice %62 {offsets = [256, 0], sizes = [128, 32], strides = [1, 1]} : vector<512x32xf32> to vector<128x32xf32>
    %cst_39 = arith.constant dense<0.000000e+00> : vector<8x32xf32>
    %72 = tpu.matmul %70, %71, %cst_39 {dimension_numbers = #tpu.dot_dimension_numbers<[1], [0], [0], [1], [0, 0, 1, 1], [], []>} : vector<8x128xf32>, vector<128x32xf32>, vector<8x32xf32> -> vector<8x32xf32>
    %73 = arith.addf %69, %72 : vector<8x32xf32>
    %c144 = arith.constant 144 : index
    %c0_40 = arith.constant 0 : index
    %74 = vector.load %arg2[%c144, %c0_40] : memref<152x128xf32, #tpu.memory_space<vmem>>, vector<8x128xf32>
    %75 = vector.extract_strided_slice %62 {offsets = [384, 0], sizes = [128, 32], strides = [1, 1]} : vector<512x32xf32> to vector<128x32xf32>
    %cst_41 = arith.constant dense<0.000000e+00> : vector<8x32xf32>
    %76 = tpu.matmul %74, %75, %cst_41 {dimension_numbers = #tpu.dot_dimension_numbers<[1], [0], [0], [1], [0, 0, 1, 1], [], []>} : vector<8x128xf32>, vector<128x32xf32>, vector<8x32xf32> -> vector<8x32xf32>
    %77 = arith.addf %73, %76 : vector<8x32xf32>
    %cst_42 = arith.constant dense<0.000000e+00> : vector<8x128xf32>
    %78 = tpu.matmul %77, %3, %cst_42 {dimension_numbers = #tpu.dot_dimension_numbers<[1], [0], [0], [1], [0, 0, 1, 1], [], []>} : vector<8x32xf32>, vector<32x128xf32>, vector<8x128xf32> -> vector<8x128xf32>
    %79 = vector.broadcast %7 : vector<1x128xf32> to vector<8x128xf32>
    %80 = arith.addf %78, %79 : vector<8x128xf32>
    %c0_43 = arith.constant 0 : index
    %c0_44 = arith.constant 0 : index
    %81 = vector.load %arg3[%c0_43, %c0_44] : memref<8x128xf32, #tpu.memory_space<vmem>>, vector<8x128xf32>
    tpu.vector_store %arg3[%c0_43, %c0_44], %80 {strides = array<i32>} : memref<8x128xf32, #tpu.memory_space<vmem>>, vector<8x128xf32>,
    return
  }
  func.func @transform_0(%arg0: i32) -> (i32, i32, i32) {
    %c0_i32 = arith.constant 0 : i32
    %c0_i32_0 = arith.constant 0 : i32
    %c0_i32_1 = arith.constant 0 : i32
    return %arg0, %c0_i32, %c0_i32_0 : i32, i32, i32
  }
  func.func @transform_1(%arg0: i32) -> (i32, i32) {
    %c0_i32 = arith.constant 0 : i32
    %c0_i32_0 = arith.constant 0 : i32
    %c0_i32_1 = arith.constant 0 : i32
    return %c0_i32, %c0_i32_0 : i32, i32
  }
  func.func @transform_2(%arg0: i32) -> (i32, i32) {
    %c0_i32 = arith.constant 0 : i32
    %c0_i32_0 = arith.constant 0 : i32
    return %arg0, %c0_i32 : i32, i32
  }
}

</mosaic_0001>

<llo_original>
// kernel: tpu_custom_call.1
$region0: #{tpu_custom_call.1}
  #allocation0 [shape = 'u32[]', space=smem, size = 0x4, offset = 0x4, fixed_abs, tag = 'smem constant byte address 0x4 - core index']
  #allocation1 [shape = 'u32[144,128]{1,0:T(1,128)}', space=vmem, size = 0x12000, scoped, tag = 'internal scratch']
  %s0 = inlined_call_operand.vmem [shape: f32[8,128,12], index: 0, kind: input, shape index: {}]
  %s1 = inlined_call_operand.vmem [shape: f32[152,128], index: 1, kind: input, shape index: {}]
  %s2 = inlined_call_operand.hbm [shape: f32[16,128], index: 2, kind: output, shape index: {}]
  %s3 = sld [smem:[#allocation0]]
  $region41: #{tpu_custom_call.1} parent=0
    _
  %s5 = ssub.s32 1, %s3
  %s6 = scalar_select 0, %s5, %s3
  $region1: #{tpu_custom_call.1} parent=0
    #allocation2 [shape = 'u8[8192]{0}', space=vmem, size = 0x2000, scoped, tag = 'output window, operand 0']
    #allocation3 [shape = 's32[2]{0}', space=sflag, size = 0x8, scoped, tag = 'scoped memory for tpu_custom_call.1']
    %7 = vsyncpa [#allocation3], 0
    %s8 = scalar_lea.sflag [#allocation3], 1
    %9 = vsyncpa %s8, 0
    loop: start=0, step=1, limit=4
    $region2: #{tpu_custom_call.1} parent=1 // loop_pre_header
      _
    $region3: #{tpu_custom_call.1} parent=1 // loop_header
      %s11 = sphi 0, %s15
      %p12 = scmp.ge.s32.totalorder %s11, 4
      %s21 = sphi 0, %s23
      %s24 = sphi 0, %s21
      %s25 = sphi 0, %s24
      %s41 = sphi 0, %s25
      %s45 = sphi 0, %s45
      %s47 = sphi 0, %s45
      %s48 = sphi 0, %s47
      %s62 = sphi 0, %s48
      %s68 = sphi 0, %s70
      %s71 = sphi 0, %s68
      %s72 = sphi 0, %s71
      %s88 = sphi 0, %s72
    $region4: #{tpu_custom_call.1} parent=1 // loop_header_branch
      %14 = sbr.rel (%p12) target = $region8
    $region5: #{tpu_custom_call.1} parent=1 // loop_body
      %s16 = ssub.s32 %s11, 1
      %s17 = ssub.s32 %s11, 2
      %s18 = sadd.s32 %s11, 1
      %s19 = ssub.s32 %s11, %s18
      %p20 = scmp.eq.s32.totalorder %s19, 0
      %s22 = sadd.s32 %s21, 1
      %s23 = scalar_select %p20, %s21, %s22
      %p26 = pneg %p20
      %p27 = scmp.eq.s32.totalorder %s11, 1
      %p28 = por %p26, %p27
      %p29 = scmp.ne.s32.totalorder %s21, %s24
      %p30 = scmp.eq.s32.totalorder %s11, 0
      %p31 = por %p29, %p30
      %p32 = scmp.ne.s32.totalorder %s21, %s24
      %p33 = scmp.eq.s32.totalorder %s16, 1
      %p34 = por %p32, %p33
      %p35 = scmp.ne.s32.totalorder %s24, %s25
      %p36 = scmp.eq.s32.totalorder %s16, 0
      %p37 = por %p35, %p36
      %p38 = scmp.ne.s32.totalorder %s24, %s25
      %p39 = scmp.eq.s32.totalorder %s17, 1
      %p40 = por %p38, %p39
      %p42 = scmp.ne.s32.totalorder %s25, %s41
      %p43 = scmp.eq.s32.totalorder %s17, 0
      %p44 = por %p42, %p43
      %s46 = sadd.s32 %s45, 1
      %p49 = scmp.eq.s32.totalorder %s11, 1
      %p50 = scmp.ne.s32.totalorder %s45, %s47
      %p51 = scmp.eq.s32.totalorder %s11, 0
      %p52 = por %p50, %p51
      %p53 = scmp.ne.s32.totalorder %s45, %s47
      %p54 = scmp.eq.s32.totalorder %s16, 1
      %p55 = por %p53, %p54
      %p56 = scmp.ne.s32.totalorder %s47, %s48
      %p57 = scmp.eq.s32.totalorder %s16, 0
      %p58 = por %p56, %p57
      %p59 = scmp.ne.s32.totalorder %s47, %s48
      %p60 = scmp.eq.s32.totalorder %s17, 1
      %p61 = por %p59, %p60
      %p63 = scmp.ne.s32.totalorder %s48, %s62
      %p64 = scmp.eq.s32.totalorder %s17, 0
      %p65 = por %p63, %p64
      %s66 = ssub.s32 %s11, %s18
      %p67 = scmp.eq.s32.totalorder %s66, 0
      %s69 = sadd.s32 %s68, 1
      %s70 = scalar_select %p67, %s68, %s69
      %p73 = pneg %p67
      %p74 = scmp.eq.s32.totalorder %s11, 1
      %p75 = por %p73, %p74
      %p76 = scmp.ne.s32.totalorder %s68, %s71
      %p77 = scmp.eq.s32.totalorder %s11, 0
      %p78 = por %p76, %p77
      %p79 = scmp.ne.s32.totalorder %s68, %s71
      %p80 = scmp.eq.s32.totalorder %s16, 1
      %p81 = por %p79, %p80
      %p82 = scmp.ne.s32.totalorder %s71, %s72
      %p83 = scmp.eq.s32.totalorder %s16, 0
      %p84 = por %p82, %p83
      %p85 = scmp.ne.s32.totalorder %s71, %s72
      %p86 = scmp.eq.s32.totalorder %s17, 1
      %p87 = por %p85, %p86
      %p89 = scmp.ne.s32.totalorder %s72, %s88
      %p90 = scmp.eq.s32.totalorder %s17, 0
      %p91 = por %p89, %p90
      %p92 = scmp.le.s32.totalorder 1, %s11
      %p93 = scmp.lt.s32.totalorder %s11, 3
      %p94 = pnand %p92, %p93
      %p95 = pneg %p94
      // Predicated region
      $region9: #{tpu_custom_call.1} parent=5 // pred_check
        _
      $region10: #{tpu_custom_call.1} parent=5 // pred_check_branch
        %97 = sbr.rel (%p94) target = $region12
      $region11: #{tpu_custom_call.1} parent=5 // pred_region
        %s98 = ssub.s32 %s11, 1
        // Predicated region
        $region13: #{tpu_custom_call.1} parent=11 // pred_check
          %p99 = pneg %p58
        $region14: #{tpu_custom_call.1} parent=11 // pred_check_branch
          %101 = sbr.rel (%p99) target = $region16
        $region15: #{tpu_custom_call.1} parent=11 // pred_region
          _
        $region16: #{tpu_custom_call.1} parent=11 // pred_fallthru
          _
      $region12: #{tpu_custom_call.1} parent=5 // pred_fallthru
        _
      %p102 = scmp.lt.s32.totalorder %s11, 2
      // Predicated region
      $region17: #{tpu_custom_call.1} parent=5 // pred_check
        %p103 = pneg %p102
      $region18: #{tpu_custom_call.1} parent=5 // pred_check_branch
        %105 = sbr.rel (%p103) target = $region20
      $region19: #{tpu_custom_call.1} parent=5 // pred_region
        // Predicated region
        $region21: #{tpu_custom_call.1} parent=19 // pred_check
          %p106 = pneg %p31
        $region22: #{tpu_custom_call.1} parent=19 // pred_check_branch
          %108 = sbr.rel (%p106) target = $region24
        $region23: #{tpu_custom_call.1} parent=19 // pred_region
          %s109 = smul.u32 4, %s11
          %p110 = scmp.lt.s32.totalorder %s109, 7
          %s111 = scalar_select %p110, %s109, 7
          %s112 = smul.addr %s111, 16
          %s113 = smul.addr %s112, 8
          %s114 = scalar_lea.vmem %s0, %s113
          %s115 = smul.u32 4, %s11
        $region24: #{tpu_custom_call.1} parent=19 // pred_fallthru
          _
      $region20: #{tpu_custom_call.1} parent=5 // pred_fallthru
        _
      %p116 = scmp.le.s32.totalorder 1, %s11
      %p117 = scmp.lt.s32.totalorder %s11, 3
      %p118 = pnand %p116, %p117
      %p119 = pneg %p118
      // Predicated region
      $region25: #{tpu_custom_call.1} parent=5 // pred_check
        _
      $region26: #{tpu_custom_call.1} parent=5 // pred_check_branch
        %121 = sbr.rel (%p118) target = $region28
      $region27: #{tpu_custom_call.1} parent=5 // pred_region
        %s122 = ssub.s32 %s11, 1
        %s123 = smul.u32 4, %s16
        %p124 = scmp.lt.s32.totalorder %s123, 7
        %s125 = scalar_select %p124, %s123, 7
        %s126 = smul.addr %s125, 16
        %s127 = smul.addr %s126, 8
        %s128 = scalar_lea.vmem %s0, %s127
        %p129 = pneg %p37
        %p130 = pneg %p34
        %p131 = pneg %p58
        %p132 = pneg %p55
        %p133 = pneg %p84
        %p134 = pneg %p81
        %s135 = sand.u32 %s71, 1
        %s136 = scalar_lea.sflag [#allocation3], %s135
        %s137 = sand.u32 %s71, 1
        %s138 = smul.addr %s137, 8
        %s139 = scalar_lea.vmem [#allocation2], %s138
        %s140 = smul.u32 4, %s16
        %p141 = scmp.lt.s32.totalorder %s140, 7
        %s142 = scalar_select %p141, %s140, 7
        %s143 = smul.addr %s142, 16
        %s144 = smul.addr %s143, 8
        %s145 = scalar_lea.vmem %s0, %s144
        %s146 = smul.u32 4, %s16
        %v147 = vld [vmem:[%s1] sm:$0xff]
        %v148 = vld [vmem:[%s1 + $0x8] sm:$0xf]
        %v149 = vld [vmem:[%s1 + $0x10] sm:$0xff]
        %v150 = vld [vmem:[%s1 + $0x18] sm:$0xff]
        %v151 = vld [vmem:[%s1 + $0x20] sm:$0xff]
        %v152 = vld [vmem:[%s1 + $0x28] sm:$0xff]
        %v153 = vld [vmem:[%s1 + $0x30] sm:$0xff]
        %v154 = vld [vmem:[%s1 + $0x38] sm:$0xff]
        %v155 = vld [vmem:[%s1 + $0x40] sm:$0xff]
        %v156 = vld [vmem:[%s1 + $0x48] sm:$0xff]
        %v157 = vld [vmem:[%s1 + $0x50] sm:$0xff]
        %v158 = vld [vmem:[%s1 + $0x58] sm:$0xff]
        %v159 = vld [vmem:[%s1 + $0x60] sm:$0xff]
        %v160 = vld [vmem:[%s1 + $0x68] sm:$0xff]
        %v161 = vld [vmem:[%s1 + $0x70] sm:$0x1]
        %v162 = vld [vmem:[%s1 + $0x71] sm:$0x1]
        %v163 = vld [vmem:[%s1 + $0x72] sm:$0x1]
        %v164 = vld [vmem:[%s1 + $0x73] sm:$0x1]
        %v165 = vld [vmem:[%s145] sm:$0xff]
        %v166 = vld [vmem:[%s145 + $0x8] sm:$0xff]
        %v167 = vld [vmem:[%s145 + $0x10] sm:$0xff]
        %v168 = vld [vmem:[%s145 + $0x18] sm:$0xff]
        %v169 = vld [vmem:[%s145 + $0x20] sm:$0xff]
        %v170 = vld [vmem:[%s145 + $0x28] sm:$0xff]
        %v171 = vld [vmem:[%s145 + $0x30] sm:$0xff]
        %v172 = vld [vmem:[%s145 + $0x38] sm:$0xff]
        %v173 = vld [vmem:[%s145 + $0x40] sm:$0xff]
        %v174 = vld [vmem:[%s145 + $0x48] sm:$0xff]
        %v175 = vld [vmem:[%s145 + $0x50] sm:$0xff]
        %v176 = vld [vmem:[%s145 + $0x58] sm:$0xff]
        %v177 = vld [vmem:[%s145 + $0x60] sm:$0xff]
        %v178 = vld [vmem:[%s145 + $0x68] sm:$0xff]
        %v179 = vld [vmem:[%s145 + $0x70] sm:$0xff]
        %v180 = vld [vmem:[%s145 + $0x78] sm:$0xff]
        %v181 = vlaneseq
        %v182 = vshrl.u32 %v181, 7
        %v183 = vsub.s32 0, %v182
        %v184 = vrot.slane %v161, %v183
        %vm185 = vcmask 97280
        %v187 = vsel %vm185, %v165, 0
        %v190 = vsel %vm185, %v166, 0
        %v193 = vsel %vm185, %v167, 0
        %v196 = vsel %vm185, %v168, 0
        %v199 = vsel %vm185, %v169, 0
        %v202 = vsel %vm185, %v170, 0
        %v205 = vsel %vm185, %v171, 0
        %v208 = vsel %vm185, %v172, 0
        %v211 = vsel %vm185, %v173, 0
        %v214 = vsel %vm185, %v174, 0
        %v217 = vsel %vm185, %v175, 0
        %v220 = vsel %vm185, %v176, 0
        %v223 = vsel %vm185, %v177, 0
        %v226 = vsel %vm185, %v178, 0
        %v229 = vsel %vm185, %v179, 0
        %v232 = vsel %vm185, %v180, 0
        %vm234 = vcmask 1043456
        %v236 = vsel %vm234, %v148, 0
        %238 = vmatprep.subr.mxu0 0.0
        %239 = vmatpush1.msra.mxu0 %v147
        %240 = vmatprep.subr.mxu0 0.0
        %241 = vmatpush1.msra.mxu0 %v236
        %242 = vmatprep.subr.mxu0 0.0
        %243 = vmatpush1.msra.mxu0 0.0
        %244 = vmatprep.subr.mxu0 0.0
        %245 = vmatpush1.msra.mxu0 0.0
        %246 = vmatprep.subr.mxu0 0.0
        %247 = vmatpush1.msra.mxu0 0.0
        %248 = vmatprep.subr.mxu0 0.0
        %249 = vmatpush1.msra.mxu0 0.0
        %250 = vmatprep.subr.mxu0 0.0
        %251 = vmatpush1.msra.mxu0 0.0
        %252 = vmatprep.subr.mxu0 0.0
        %253 = vmatpush1.msra.mxu0 0.0
        %254 = vmatprep.subr.mxu0 0.0
        %255 = vmatpush1.msra.mxu0 0.0
        %256 = vmatprep.subr.mxu0 0.0
        %257 = vmatpush1.msra.mxu0 0.0
        %258 = vmatprep.subr.mxu0 0.0
        %259 = vmatpush1.msra.mxu0 0.0
        %260 = vmatprep.subr.mxu0 0.0
        %261 = vmatpush1.msra.mxu0 0.0
        %262 = vmatprep.subr.mxu0 0.0
        %263 = vmatpush1.msra.mxu0 0.0
        %264 = vmatprep.subr.mxu0 0.0
        %265 = vmatpush1.msra.mxu0 0.0
        %266 = vmatprep.subr.mxu0 0.0
        %267 = vmatpush1.msra.mxu0 0.0
        %268 = vmatprep.subr.mxu0 0.0
        %269 = vmatpush1.msra.mxu0 0.0
        %270 = vmatprep.subr.mxu0 0.0
        %271 = vmatpush1.msra.mxu0 0.0
        %272 = vmatprep.subr.mxu0 0.0
        %273 = vmatpush1.msra.mxu0 0.0
        %274 = vmatprep.subr.mxu0 0.0
        %275 = vmatpush1.msra.mxu0 0.0
        %276 = vmatprep.subr.mxu0 0.0
        %277 = vmatpush1.msra.mxu0 0.0
        %278 = vmatprep.subr.mxu0 0.0
        %279 = vmatpush1.msra.mxu0 0.0
        %280 = vmatprep.subr.mxu0 0.0
        %281 = vmatpush1.msra.mxu0 0.0
        %282 = vmatprep.subr.mxu0 0.0
        %283 = vmatpush1.msra.mxu0 0.0
        %284 = vmatprep.subr.mxu0 0.0
        %285 = vmatpush1.msra.mxu0 0.0
        %286 = vmatprep.subr.mxu0 0.0
        %287 = vmatpush1.msra.mxu0 0.0
        %288 = vmatprep.subr.mxu0 0.0
        %289 = vmatpush1.msra.mxu0 0.0
        %290 = vmatprep.subr.mxu0 0.0
        %291 = vmatpush1.msra.mxu0 0.0
        %292 = vmatprep.subr.mxu0 0.0
        %293 = vmatpush1.msra.mxu0 0.0
        %294 = vmatprep.subr.mxu0 0.0
        %295 = vmatpush1.msra.mxu0 0.0
        %296 = vmatprep.subr.mxu0 0.0
        %297 = vmatpush1.msra.mxu0 0.0
        %298 = vmatprep.subr.mxu0 0.0
        %299 = vmatpush1.msra.mxu0 0.0
        %300 = vmatprep.subr.mxu0 0.0
        %301 = vmatpush1.msra.mxu0 0.0
        %302 = vmatprep.mubr.f32.mxu0 0.0
        %303 = vmatmul.mubr.f32.gmra.mrb[0].mxu0 %v187
        %v304 = vpop.f32.mrb[0].mxu0
        %v305 = vadd.f32 %v184, %v304
        %v306 = vpop.f32.mrb[0].mxu0
        %307 = vmatprep.mubr.f32.mxu0 0.0
        %308 = vmatmul.mubr.f32.gmra.mrb[0].mxu0 %v190
        %v309 = vpop.f32.mrb[0].mxu0
        %v310 = vadd.f32 %v184, %v309
        %v311 = vpop.f32.mrb[0].mxu0
        %312 = vmatprep.mubr.f32.mxu0 0.0
        %313 = vmatmul.mubr.f32.gmra.mrb[0].mxu0 %v193
        %v314 = vpop.f32.mrb[0].mxu0
        %v315 = vadd.f32 %v184, %v314
        %v316 = vpop.f32.mrb[0].mxu0
        %317 = vmatprep.mubr.f32.mxu0 0.0
        %318 = vmatmul.mubr.f32.gmra.mrb[0].mxu0 %v196
        %v319 = vpop.f32.mrb[0].mxu0
        %v320 = vadd.f32 %v184, %v319
        %v321 = vpop.f32.mrb[0].mxu0
        %322 = vmatprep.mubr.f32.mxu0 0.0
        %323 = vmatmul.mubr.f32.gmra.mrb[0].mxu0 %v199
        %v324 = vpop.f32.mrb[0].mxu0
        %v325 = vadd.f32 %v184, %v324
        %v326 = vpop.f32.mrb[0].mxu0
        %327 = vmatprep.mubr.f32.mxu0 0.0
        %328 = vmatmul.mubr.f32.gmra.mrb[0].mxu0 %v202
        %v329 = vpop.f32.mrb[0].mxu0
        %v330 = vadd.f32 %v184, %v329
        %v331 = vpop.f32.mrb[0].mxu0
        %332 = vmatprep.mubr.f32.mxu0 0.0
        %333 = vmatmul.mubr.f32.gmra.mrb[0].mxu0 %v205
        %v334 = vpop.f32.mrb[0].mxu0
        %v335 = vadd.f32 %v184, %v334
        %v336 = vpop.f32.mrb[0].mxu0
        %337 = vmatprep.mubr.f32.mxu0 0.0
        %338 = vmatmul.mubr.f32.gmra.mrb[0].mxu0 %v208
        %v339 = vpop.f32.mrb[0].mxu0
        %v340 = vadd.f32 %v184, %v339
        %v341 = vpop.f32.mrb[0].mxu0
        %342 = vmatprep.mubr.f32.mxu0 0.0
        %343 = vmatmul.mubr.f32.gmra.mrb[0].mxu0 %v211
        %v344 = vpop.f32.mrb[0].mxu0
        %v345 = vadd.f32 %v184, %v344
        %v346 = vpop.f32.mrb[0].mxu0
        %347 = vmatprep.mubr.f32.mxu0 0.0
        %348 = vmatmul.mubr.f32.gmra.mrb[0].mxu0 %v214
        %v349 = vpop.f32.mrb[0].mxu0
        %v350 = vadd.f32 %v184, %v349
        %v351 = vpop.f32.mrb[0].mxu0
        %352 = vmatprep.mubr.f32.mxu0 0.0
        %353 = vmatmul.mubr.f32.gmra.mrb[0].mxu0 %v217
        %v354 = vpop.f32.mrb[0].mxu0
        %v355 = vadd.f32 %v184, %v354
        %v356 = vpop.f32.mrb[0].mxu0
        %357 = vmatprep.mubr.f32.mxu0 0.0
        %358 = vmatmul.mubr.f32.gmra.mrb[0].mxu0 %v220
        %v359 = vpop.f32.mrb[0].mxu0
        %v360 = vadd.f32 %v184, %v359
        %v361 = vpop.f32.mrb[0].mxu0
        %362 = vmatprep.mubr.f32.mxu0 0.0
        %363 = vmatmul.mubr.f32.gmra.mrb[0].mxu0 %v223
        %v364 = vpop.f32.mrb[0].mxu0
        %v365 = vadd.f32 %v184, %v364
        %v366 = vpop.f32.mrb[0].mxu0
        %367 = vmatprep.mubr.f32.mxu0 0.0
        %368 = vmatmul.mubr.f32.gmra.mrb[0].mxu0 %v226
        %v369 = vpop.f32.mrb[0].mxu0
        %v370 = vadd.f32 %v184, %v369
        %v371 = vpop.f32.mrb[0].mxu0
        %372 = vmatprep.mubr.f32.mxu0 0.0
        %373 = vmatmul.mubr.f32.gmra.mrb[0].mxu0 %v229
        %v374 = vpop.f32.mrb[0].mxu0
        %v375 = vadd.f32 %v184, %v374
        %v376 = vpop.f32.mrb[0].mxu0
        %377 = vmatprep.mubr.f32.mxu0 0.0
        %378 = vmatmul.mubr.f32.gmra.mrb[0].mxu0 %v232
        %v379 = vpop.f32.mrb[0].mxu0
        %v380 = vadd.f32 %v184, %v379
        %v381 = vpop.f32.mrb[0].mxu0
        %382 = vdwg.mxu0
        %v383 = vmax.f32 %v305, 0.0
        %v384 = vmax.f32 %v310, 0.0
        %v385 = vmax.f32 %v315, 0.0
        %v386 = vmax.f32 %v320, 0.0
        %v387 = vmax.f32 %v325, 0.0
        %v388 = vmax.f32 %v330, 0.0
        %v389 = vmax.f32 %v335, 0.0
        %v390 = vmax.f32 %v340, 0.0
        %v391 = vmax.f32 %v345, 0.0
        %v392 = vmax.f32 %v350, 0.0
        %v393 = vmax.f32 %v355, 0.0
        %v394 = vmax.f32 %v360, 0.0
        %v395 = vmax.f32 %v365, 0.0
        %v396 = vmax.f32 %v370, 0.0
        %v397 = vmax.f32 %v375, 0.0
        %v398 = vmax.f32 %v380, 0.0
        %v399 = vrot.slane %v383, 7
        %v400 = vrot.slane %v384, 7
        %v401 = vrot.slane %v385, 7
        %v402 = vrot.slane %v386, 7
        %v403 = vrot.slane %v387, 7
        %v404 = vrot.slane %v388, 7
        %v405 = vrot.slane %v389, 7
        %v406 = vrot.slane %v390, 7
        %v407 = vrot.slane %v391, 7
        %v408 = vrot.slane %v392, 7
        %v409 = vrot.slane %v393, 7
        %v410 = vrot.slane %v394, 7
        %v411 = vrot.slane %v395, 7
        %v412 = vrot.slane %v396, 7
        %v413 = vrot.slane %v397, 7
        %v414 = vrot.slane %v398, 7
        %v415 = vlaneseq
        %v416 = vshrl.u32 %v415, 7
        %vm417 = vcmp.lt.s32.totalorder %v416, 1
        %v418 = vsel %vm417, %v413, %v414
        %v419 = vsel %vm417, %v412, %v413
        %v420 = vsel %vm417, %v411, %v412
        %v421 = vsel %vm417, %v410, %v411
        %v422 = vsel %vm417, %v409, %v410
        %v423 = vsel %vm417, %v408, %v409
        %v424 = vsel %vm417, %v407, %v408
        %v425 = vsel %vm417, %v406, %v407
        %v426 = vsel %vm417, %v405, %v406
        %v427 = vsel %vm417, %v404, %v405
        %v428 = vsel %vm417, %v403, %v404
        %v429 = vsel %vm417, %v402, %v403
        %v430 = vsel %vm417, %v401, %v402
        %v431 = vsel %vm417, %v400, %v401
        %v432 = vsel %vm417, %v399, %v400
        %v433 = vsel %vm417, %v414, %v399
        %v434 = vadd.f32 %v383, %v433
        %v435 = vadd.f32 %v384, %v432
        %v436 = vadd.f32 %v385, %v431
        %v437 = vadd.f32 %v386, %v430
        %v438 = vadd.f32 %v387, %v429
        %v439 = vadd.f32 %v388, %v428
        %v440 = vadd.f32 %v389, %v427
        %v441 = vadd.f32 %v390, %v426
        %v442 = vadd.f32 %v391, %v425
        %v443 = vadd.f32 %v392, %v424
        %v444 = vadd.f32 %v393, %v423
        %v445 = vadd.f32 %v394, %v422
        %v446 = vadd.f32 %v395, %v421
        %v447 = vadd.f32 %v396, %v420
        %v448 = vadd.f32 %v397, %v419
        %v449 = vadd.f32 %v398, %v418
        %v450 = vrot.slane %v383, 1
        %v451 = vrot.slane %v384, 1
        %v452 = vrot.slane %v385, 1
        %v453 = vrot.slane %v386, 1
        %v454 = vrot.slane %v387, 1
        %v455 = vrot.slane %v388, 1
        %v456 = vrot.slane %v389, 1
        %v457 = vrot.slane %v390, 1
        %v458 = vrot.slane %v391, 1
        %v459 = vrot.slane %v392, 1
        %v460 = vrot.slane %v393, 1
        %v461 = vrot.slane %v394, 1
        %v462 = vrot.slane %v395, 1
        %v463 = vrot.slane %v396, 1
        %v464 = vrot.slane %v397, 1
        %v465 = vrot.slane %v398, 1
        %vm466 = vcmp.lt.s32.totalorder %v416, 7
        %v467 = vsel %vm466, %v464, %v465
        %v468 = vsel %vm466, %v463, %v464
        %v469 = vsel %vm466, %v462, %v463
        %v470 = vsel %vm466, %v461, %v462
        %v471 = vsel %vm466, %v460, %v461
        %v472 = vsel %vm466, %v459, %v460
        %v473 = vsel %vm466, %v458, %v459
        %v474 = vsel %vm466, %v457, %v458
        %v475 = vsel %vm466, %v456, %v457
        %v476 = vsel %vm466, %v455, %v456
        %v477 = vsel %vm466, %v454, %v455
        %v478 = vsel %vm466, %v453, %v454
        %v479 = vsel %vm466, %v452, %v453
        %v480 = vsel %vm466, %v451, %v452
        %v481 = vsel %vm466, %v450, %v451
        %v482 = vsel %vm466, %v465, %v450
        %v483 = vadd.f32 %v434, %v481
        %v484 = vadd.f32 %v435, %v480
        %v485 = vadd.f32 %v436, %v479
        %v486 = vadd.f32 %v437, %v478
        %v487 = vadd.f32 %v438, %v477
        %v488 = vadd.f32 %v439, %v476
        %v489 = vadd.f32 %v440, %v475
        %v490 = vadd.f32 %v441, %v474
        %v491 = vadd.f32 %v442, %v473
        %v492 = vadd.f32 %v443, %v472
        %v493 = vadd.f32 %v444, %v471
        %v494 = vadd.f32 %v445, %v470
        %v495 = vadd.f32 %v446, %v469
        %v496 = vadd.f32 %v447, %v468
        %v497 = vadd.f32 %v448, %v467
        %v498 = vadd.f32 %v449, %v482
        %s499 = scalar_lea.vmem %s145, 128
        %v500 = vld [vmem:[%s499] sm:$0xff]
        %v501 = vld [vmem:[%s499 + $0x8] sm:$0xff]
        %v502 = vld [vmem:[%s499 + $0x10] sm:$0xff]
        %v503 = vld [vmem:[%s499 + $0x18] sm:$0xff]
        %v504 = vld [vmem:[%s499 + $0x20] sm:$0xff]
        %v505 = vld [vmem:[%s499 + $0x28] sm:$0xff]
        %v506 = vld [vmem:[%s499 + $0x30] sm:$0xff]
        %v507 = vld [vmem:[%s499 + $0x38] sm:$0xff]
        %v508 = vld [vmem:[%s499 + $0x40] sm:$0xff]
        %v509 = vld [vmem:[%s499 + $0x48] sm:$0xff]
        %v510 = vld [vmem:[%s499 + $0x50] sm:$0xff]
        %v511 = vld [vmem:[%s499 + $0x58] sm:$0xff]
        %v512 = vld [vmem:[%s499 + $0x60] sm:$0xff]
        %v513 = vld [vmem:[%s499 + $0x68] sm:$0xff]
        %v514 = vld [vmem:[%s499 + $0x70] sm:$0xff]
        %v515 = vld [vmem:[%s499 + $0x78] sm:$0xff]
        %v517 = vsel %vm185, %v500, 0
        %v520 = vsel %vm185, %v501, 0
        %v523 = vsel %vm185, %v502, 0
        %v526 = vsel %vm185, %v503, 0
        %v529 = vsel %vm185, %v504, 0
        %v532 = vsel %vm185, %v505, 0
        %v535 = vsel %vm185, %v506, 0
        %v538 = vsel %vm185, %v507, 0
        %v541 = vsel %vm185, %v508, 0
        %v544 = vsel %vm185, %v509, 0
        %v547 = vsel %vm185, %v510, 0
        %v550 = vsel %vm185, %v511, 0
        %v553 = vsel %vm185, %v512, 0
        %v556 = vsel %vm185, %v513, 0
        %v559 = vsel %vm185, %v514, 0
        %v562 = vsel %vm185, %v515, 0
        %564 = vmatprep.subr.mxu0 0.0
        %565 = vmatpush1.msra.mxu0 %v147
        %566 = vmatprep.subr.mxu0 0.0
        %567 = vmatpush1.msra.mxu0 %v236
        %568 = vmatprep.subr.mxu0 0.0
        %569 = vmatpush1.msra.mxu0 0.0
        %570 = vmatprep.subr.mxu0 0.0
        %571 = vmatpush1.msra.mxu0 0.0
        %572 = vmatprep.subr.mxu0 0.0
        %573 = vmatpush1.msra.mxu0 0.0
        %574 = vmatprep.subr.mxu0 0.0
        %575 = vmatpush1.msra.mxu0 0.0
        %576 = vmatprep.subr.mxu0 0.0
        %577 = vmatpush1.msra.mxu0 0.0
        %578 = vmatprep.subr.mxu0 0.0
        %579 = vmatpush1.msra.mxu0 0.0
        %580 = vmatprep.subr.mxu0 0.0
        %581 = vmatpush1.msra.mxu0 0.0
        %582 = vmatprep.subr.mxu0 0.0
        %583 = vmatpush1.msra.mxu0 0.0
        %584 = vmatprep.subr.mxu0 0.0
        %585 = vmatpush1.msra.mxu0 0.0
        %586 = vmatprep.subr.mxu0 0.0
        %587 = vmatpush1.msra.mxu0 0.0
        %588 = vmatprep.subr.mxu0 0.0
        %589 = vmatpush1.msra.mxu0 0.0
        %590 = vmatprep.subr.mxu0 0.0
        %591 = vmatpush1.msra.mxu0 0.0
        %592 = vmatprep.subr.mxu0 0.0
        %593 = vmatpush1.msra.mxu0 0.0
        %594 = vmatprep.subr.mxu0 0.0
        %595 = vmatpush1.msra.mxu0 0.0
        %596 = vmatprep.subr.mxu0 0.0
        %597 = vmatpush1.msra.mxu0 0.0
        %598 = vmatprep.subr.mxu0 0.0
        %599 = vmatpush1.msra.mxu0 0.0
        %600 = vmatprep.subr.mxu0 0.0
        %601 = vmatpush1.msra.mxu0 0.0
        %602 = vmatprep.subr.mxu0 0.0
        %603 = vmatpush1.msra.mxu0 0.0
        %604 = vmatprep.subr.mxu0 0.0
        %605 = vmatpush1.msra.mxu0 0.0
        %606 = vmatprep.subr.mxu0 0.0
        %607 = vmatpush1.msra.mxu0 0.0
        %608 = vmatprep.subr.mxu0 0.0
        %609 = vmatpush1.msra.mxu0 0.0
        %610 = vmatprep.subr.mxu0 0.0
        %611 = vmatpush1.msra.mxu0 0.0
        %612 = vmatprep.subr.mxu0 0.0
        %613 = vmatpush1.msra.mxu0 0.0
        %614 = vmatprep.subr.mxu0 0.0
        %615 = vmatpush1.msra.mxu0 0.0
        %616 = vmatprep.subr.mxu0 0.0
        %617 = vmatpush1.msra.mxu0 0.0
        %618 = vmatprep.subr.mxu0 0.0
        %619 = vmatpush1.msra.mxu0 0.0
        %620 = vmatprep.subr.mxu0 0.0
        %621 = vmatpush1.msra.mxu0 0.0
        %622 = vmatprep.subr.mxu0 0.0
        %623 = vmatpush1.msra.mxu0 0.0
        %624 = vmatprep.subr.mxu0 0.0
        %625 = vmatpush1.msra.mxu0 0.0
        %626 = vmatprep.subr.mxu0 0.0
        %627 = vmatpush1.msra.mxu0 0.0
        %628 = vmatprep.mubr.f32.mxu0 0.0
        %629 = vmatmul.mubr.f32.gmra.mrb[0].mxu0 %v517
        %v630 = vpop.f32.mrb[0].mxu0
        %v631 = vadd.f32 %v184, %v630
        %v632 = vpop.f32.mrb[0].mxu0
        %633 = vmatprep.mubr.f32.mxu0 0.0
        %634 = vmatmul.mubr.f32.gmra.mrb[0].mxu0 %v520
        %v635 = vpop.f32.mrb[0].mxu0
        %v636 = vadd.f32 %v184, %v635
        %v637 = vpop.f32.mrb[0].mxu0
        %638 = vmatprep.mubr.f32.mxu0 0.0
        %639 = vmatmul.mubr.f32.gmra.mrb[0].mxu0 %v523
        %v640 = vpop.f32.mrb[0].mxu0
        %v641 = vadd.f32 %v184, %v640
        %v642 = vpop.f32.mrb[0].mxu0
        %643 = vmatprep.mubr.f32.mxu0 0.0
        %644 = vmatmul.mubr.f32.gmra.mrb[0].mxu0 %v526
        %v645 = vpop.f32.mrb[0].mxu0
        %v646 = vadd.f32 %v184, %v645
        %v647 = vpop.f32.mrb[0].mxu0
        %648 = vmatprep.mubr.f32.mxu0 0.0
        %649 = vmatmul.mubr.f32.gmra.mrb[0].mxu0 %v529
        %v650 = vpop.f32.mrb[0].mxu0
        %v651 = vadd.f32 %v184, %v650
        %v652 = vpop.f32.mrb[0].mxu0
        %653 = vmatprep.mubr.f32.mxu0 0.0
        %654 = vmatmul.mubr.f32.gmra.mrb[0].mxu0 %v532
        %v655 = vpop.f32.mrb[0].mxu0
        %v656 = vadd.f32 %v184, %v655
        %v657 = vpop.f32.mrb[0].mxu0
        %658 = vmatprep.mubr.f32.mxu0 0.0
        %659 = vmatmul.mubr.f32.gmra.mrb[0].mxu0 %v535
        %v660 = vpop.f32.mrb[0].mxu0
        %v661 = vadd.f32 %v184, %v660
        %v662 = vpop.f32.mrb[0].mxu0
        %663 = vmatprep.mubr.f32.mxu0 0.0
        %664 = vmatmul.mubr.f32.gmra.mrb[0].mxu0 %v538
        %v665 = vpop.f32.mrb[0].mxu0
        %v666 = vadd.f32 %v184, %v665
        %v667 = vpop.f32.mrb[0].mxu0
        %668 = vmatprep.mubr.f32.mxu0 0.0
        %669 = vmatmul.mubr.f32.gmra.mrb[0].mxu0 %v541
        %v670 = vpop.f32.mrb[0].mxu0
        %v671 = vadd.f32 %v184, %v670
        %v672 = vpop.f32.mrb[0].mxu0
        %673 = vmatprep.mubr.f32.mxu0 0.0
        %674 = vmatmul.mubr.f32.gmra.mrb[0].mxu0 %v544
        %v675 = vpop.f32.mrb[0].mxu0
        %v676 = vadd.f32 %v184, %v675
        %v677 = vpop.f32.mrb[0].mxu0
        %678 = vmatprep.mubr.f32.mxu0 0.0
        %679 = vmatmul.mubr.f32.gmra.mrb[0].mxu0 %v547
        %v680 = vpop.f32.mrb[0].mxu0
        %v681 = vadd.f32 %v184, %v680
        %v682 = vpop.f32.mrb[0].mxu0
        %683 = vmatprep.mubr.f32.mxu0 0.0
        %684 = vmatmul.mubr.f32.gmra.mrb[0].mxu0 %v550
        %v685 = vpop.f32.mrb[0].mxu0
        %v686 = vadd.f32 %v184, %v685
        %v687 = vpop.f32.mrb[0].mxu0
        %688 = vmatprep.mubr.f32.mxu0 0.0
        %689 = vmatmul.mubr.f32.gmra.mrb[0].mxu0 %v553
        %v690 = vpop.f32.mrb[0].mxu0
        %v691 = vadd.f32 %v184, %v690
        %v692 = vpop.f32.mrb[0].mxu0
        %693 = vmatprep.mubr.f32.mxu0 0.0
        %694 = vmatmul.mubr.f32.gmra.mrb[0].mxu0 %v556
        %v695 = vpop.f32.mrb[0].mxu0
        %v696 = vadd.f32 %v184, %v695
        %v697 = vpop.f32.mrb[0].mxu0
        %698 = vmatprep.mubr.f32.mxu0 0.0
        %699 = vmatmul.mubr.f32.gmra.mrb[0].mxu0 %v559
        %v700 = vpop.f32.mrb[0].mxu0
        %v701 = vadd.f32 %v184, %v700
        %v702 = vpop.f32.mrb[0].mxu0
        %703 = vmatprep.mubr.f32.mxu0 0.0
        %704 = vmatmul.mubr.f32.gmra.mrb[0].mxu0 %v562
        %v705 = vpop.f32.mrb[0].mxu0
        %v706 = vadd.f32 %v184, %v705
        %v707 = vpop.f32.mrb[0].mxu0
        %708 = vdwg.mxu0
        %v709 = vmax.f32 %v631, 0.0
        %v710 = vmax.f32 %v636, 0.0
        %v711 = vmax.f32 %v641, 0.0
        %v712 = vmax.f32 %v646, 0.0
        %v713 = vmax.f32 %v651, 0.0
        %v714 = vmax.f32 %v656, 0.0
        %v715 = vmax.f32 %v661, 0.0
        %v716 = vmax.f32 %v666, 0.0
        %v717 = vmax.f32 %v671, 0.0
        %v718 = vmax.f32 %v676, 0.0
        %v719 = vmax.f32 %v681, 0.0
        %v720 = vmax.f32 %v686, 0.0
        %v721 = vmax.f32 %v691, 0.0
        %v722 = vmax.f32 %v696, 0.0
        %v723 = vmax.f32 %v701, 0.0
        %v724 = vmax.f32 %v706, 0.0
        %v725 = vrot.slane %v709, 7
        %v726 = vrot.slane %v710, 7
        %v727 = vrot.slane %v711, 7
        %v728 = vrot.slane %v712, 7
        %v729 = vrot.slane %v713, 7
        %v730 = vrot.slane %v714, 7
        %v731 = vrot.slane %v715, 7
        %v732 = vrot.slane %v716, 7
        %v733 = vrot.slane %v717, 7
        %v734 = vrot.slane %v718, 7
        %v735 = vrot.slane %v719, 7
        %v736 = vrot.slane %v720, 7
        %v737 = vrot.slane %v721, 7
        %v738 = vrot.slane %v722, 7
        %v739 = vrot.slane %v723, 7
        %v740 = vrot.slane %v724, 7
        %v741 = vsel %vm417, %v739, %v740
        %v742 = vsel %vm417, %v738, %v739
        %v743 = vsel %vm417, %v737, %v738
        %v744 = vsel %vm417, %v736, %v737
        %v745 = vsel %vm417, %v735, %v736
        %v746 = vsel %vm417, %v734, %v735
        %v747 = vsel %vm417, %v733, %v734
        %v748 = vsel %vm417, %v732, %v733
        %v749 = vsel %vm417, %v731, %v732
        %v750 = vsel %vm417, %v730, %v731
        %v751 = vsel %vm417, %v729, %v730
        %v752 = vsel %vm417, %v728, %v729
        %v753 = vsel %vm417, %v727, %v728
        %v754 = vsel %vm417, %v726, %v727
        %v755 = vsel %vm417, %v725, %v726
        %v756 = vsel %vm417, %v740, %v725
        %v757 = vadd.f32 %v709, %v756
        %v758 = vadd.f32 %v710, %v755
        %v759 = vadd.f32 %v711, %v754
        %v760 = vadd.f32 %v712, %v753
        %v761 = vadd.f32 %v713, %v752
        %v762 = vadd.f32 %v714, %v751
        %v763 = vadd.f32 %v715, %v750
        %v764 = vadd.f32 %v716, %v749
        %v765 = vadd.f32 %v717, %v748
        %v766 = vadd.f32 %v718, %v747
        %v767 = vadd.f32 %v719, %v746
        %v768 = vadd.f32 %v720, %v745
        %v769 = vadd.f32 %v721, %v744
        %v770 = vadd.f32 %v722, %v743
        %v771 = vadd.f32 %v723, %v742
        %v772 = vadd.f32 %v724, %v741
        %v773 = vrot.slane %v709, 1
        %v774 = vrot.slane %v710, 1
        %v775 = vrot.slane %v711, 1
        %v776 = vrot.slane %v712, 1
        %v777 = vrot.slane %v713, 1
        %v778 = vrot.slane %v714, 1
        %v779 = vrot.slane %v715, 1
        %v780 = vrot.slane %v716, 1
        %v781 = vrot.slane %v717, 1
        %v782 = vrot.slane %v718, 1
        %v783 = vrot.slane %v719, 1
        %v784 = vrot.slane %v720, 1
        %v785 = vrot.slane %v721, 1
        %v786 = vrot.slane %v722, 1
        %v787 = vrot.slane %v723, 1
        %v788 = vrot.slane %v724, 1
        %v789 = vsel %vm466, %v787, %v788
        %v790 = vsel %vm466, %v786, %v787
        %v791 = vsel %vm466, %v785, %v786
        %v792 = vsel %vm466, %v784, %v785
        %v793 = vsel %vm466, %v783, %v784
        %v794 = vsel %vm466, %v782, %v783
        %v795 = vsel %vm466, %v781, %v782
        %v796 = vsel %vm466, %v780, %v781
        %v797 = vsel %vm466, %v779, %v780
        %v798 = vsel %vm466, %v778, %v779
        %v799 = vsel %vm466, %v777, %v778
        %v800 = vsel %vm466, %v776, %v777
        %v801 = vsel %vm466, %v775, %v776
        %v802 = vsel %vm466, %v774, %v775
        %v803 = vsel %vm466, %v773, %v774
        %v804 = vsel %vm466, %v788, %v773
        %v805 = vadd.f32 %v757, %v803
        %v806 = vadd.f32 %v758, %v802
        %v807 = vadd.f32 %v759, %v801
        %v808 = vadd.f32 %v760, %v800
        %v809 = vadd.f32 %v761, %v799
        %v810 = vadd.f32 %v762, %v798
        %v811 = vadd.f32 %v763, %v797
        %v812 = vadd.f32 %v764, %v796
        %v813 = vadd.f32 %v765, %v795
        %v814 = vadd.f32 %v766, %v794
        %v815 = vadd.f32 %v767, %v793
        %v816 = vadd.f32 %v768, %v792
        %v817 = vadd.f32 %v769, %v791
        %v818 = vadd.f32 %v770, %v790
        %v819 = vadd.f32 %v771, %v789
        %v820 = vadd.f32 %v772, %v804
        %s821 = scalar_lea.vmem %s145, 256
        %v822 = vld [vmem:[%s821] sm:$0xff]
        %v823 = vld [vmem:[%s821 + $0x8] sm:$0xff]
        %v824 = vld [vmem:[%s821 + $0x10] sm:$0xff]
        %v825 = vld [vmem:[%s821 + $0x18] sm:$0xff]
        %v826 = vld [vmem:[%s821 + $0x20] sm:$0xff]
        %v827 = vld [vmem:[%s821 + $0x28] sm:$0xff]
        %v828 = vld [vmem:[%s821 + $0x30] sm:$0xff]
        %v829 = vld [vmem:[%s821 + $0x38] sm:$0xff]
        %v830 = vld [vmem:[%s821 + $0x40] sm:$0xff]
        %v831 = vld [vmem:[%s821 + $0x48] sm:$0xff]
        %v832 = vld [vmem:[%s821 + $0x50] sm:$0xff]
        %v833 = vld [vmem:[%s821 + $0x58] sm:$0xff]
        %v834 = vld [vmem:[%s821 + $0x60] sm:$0xff]
        %v835 = vld [vmem:[%s821 + $0x68] sm:$0xff]
        %v836 = vld [vmem:[%s821 + $0x70] sm:$0xff]
        %v837 = vld [vmem:[%s821 + $0x78] sm:$0xff]
        %v839 = vsel %vm185, %v822, 0
        %v842 = vsel %vm185, %v823, 0
        %v845 = vsel %vm185, %v824, 0
        %v848 = vsel %vm185, %v825, 0
        %v851 = vsel %vm185, %v826, 0
        %v854 = vsel %vm185, %v827, 0
        %v857 = vsel %vm185, %v828, 0
        %v860 = vsel %vm185, %v829, 0
        %v863 = vsel %vm185, %v830, 0
        %v866 = vsel %vm185, %v831, 0
        %v869 = vsel %vm185, %v832, 0
        %v872 = vsel %vm185, %v833, 0
        %v875 = vsel %vm185, %v834, 0
        %v878 = vsel %vm185, %v835, 0
        %v881 = vsel %vm185, %v836, 0
        %v884 = vsel %vm185, %v837, 0
        %886 = vmatprep.subr.mxu0 0.0
        %887 = vmatpush1.msra.mxu0 %v147
        %888 = vmatprep.subr.mxu0 0.0
        %889 = vmatpush1.msra.mxu0 %v236
        %890 = vmatprep.subr.mxu0 0.0
        %891 = vmatpush1.msra.mxu0 0.0
        %892 = vmatprep.subr.mxu0 0.0
        %893 = vmatpush1.msra.mxu0 0.0
        %894 = vmatprep.subr.mxu0 0.0
        %895 = vmatpush1.msra.mxu0 0.0
        %896 = vmatprep.subr.mxu0 0.0
        %897 = vmatpush1.msra.mxu0 0.0
        %898 = vmatprep.subr.mxu0 0.0
        %899 = vmatpush1.msra.mxu0 0.0
        %900 = vmatprep.subr.mxu0 0.0
        %901 = vmatpush1.msra.mxu0 0.0
        %902 = vmatprep.subr.mxu0 0.0
        %903 = vmatpush1.msra.mxu0 0.0
        %904 = vmatprep.subr.mxu0 0.0
        %905 = vmatpush1.msra.mxu0 0.0
        %906 = vmatprep.subr.mxu0 0.0
        %907 = vmatpush1.msra.mxu0 0.0
        %908 = vmatprep.subr.mxu0 0.0
        %909 = vmatpush1.msra.mxu0 0.0
        %910 = vmatprep.subr.mxu0 0.0
        %911 = vmatpush1.msra.mxu0 0.0
        %912 = vmatprep.subr.mxu0 0.0
        %913 = vmatpush1.msra.mxu0 0.0
        %914 = vmatprep.subr.mxu0 0.0
        %915 = vmatpush1.msra.mxu0 0.0
        %916 = vmatprep.subr.mxu0 0.0
        %917 = vmatpush1.msra.mxu0 0.0
        %918 = vmatprep.subr.mxu0 0.0
        %919 = vmatpush1.msra.mxu0 0.0
        %920 = vmatprep.subr.mxu0 0.0
        %921 = vmatpush1.msra.mxu0 0.0
        %922 = vmatprep.subr.mxu0 0.0
        %923 = vmatpush1.msra.mxu0 0.0
        %924 = vmatprep.subr.mxu0 0.0
        %925 = vmatpush1.msra.mxu0 0.0
        %926 = vmatprep.subr.mxu0 0.0
        %927 = vmatpush1.msra.mxu0 0.0
        %928 = vmatprep.subr.mxu0 0.0
        %929 = vmatpush1.msra.mxu0 0.0
        %930 = vmatprep.subr.mxu0 0.0
        %931 = vmatpush1.msra.mxu0 0.0
        %932 = vmatprep.subr.mxu0 0.0
        %933 = vmatpush1.msra.mxu0 0.0
        %934 = vmatprep.subr.mxu0 0.0
        %935 = vmatpush1.msra.mxu0 0.0
        %936 = vmatprep.subr.mxu0 0.0
        %937 = vmatpush1.msra.mxu0 0.0
        %938 = vmatprep.subr.mxu0 0.0
        %939 = vmatpush1.msra.mxu0 0.0
        %940 = vmatprep.subr.mxu0 0.0
        %941 = vmatpush1.msra.mxu0 0.0
        %942 = vmatprep.subr.mxu0 0.0
        %943 = vmatpush1.msra.mxu0 0.0
        %944 = vmatprep.subr.mxu0 0.0
        %945 = vmatpush1.msra.mxu0 0.0
        %946 = vmatprep.subr.mxu0 0.0
        %947 = vmatpush1.msra.mxu0 0.0
        %948 = vmatprep.subr.mxu0 0.0
        %949 = vmatpush1.msra.mxu0 0.0
        %950 = vmatprep.mubr.f32.mxu0 0.0
        %951 = vmatmul.mubr.f32.gmra.mrb[0].mxu0 %v839
        %v952 = vpop.f32.mrb[0].mxu0
        %v953 = vadd.f32 %v184, %v952
        %v954 = vpop.f32.mrb[0].mxu0
        %955 = vmatprep.mubr.f32.mxu0 0.0
        %956 = vmatmul.mubr.f32.gmra.mrb[0].mxu0 %v842
        %v957 = vpop.f32.mrb[0].mxu0
        %v958 = vadd.f32 %v184, %v957
        %v959 = vpop.f32.mrb[0].mxu0
        %960 = vmatprep.mubr.f32.mxu0 0.0
        %961 = vmatmul.mubr.f32.gmra.mrb[0].mxu0 %v845
        %v962 = vpop.f32.mrb[0].mxu0
        %v963 = vadd.f32 %v184, %v962
        %v964 = vpop.f32.mrb[0].mxu0
        %965 = vmatprep.mubr.f32.mxu0 0.0
        %966 = vmatmul.mubr.f32.gmra.mrb[0].mxu0 %v848
        %v967 = vpop.f32.mrb[0].mxu0
        %v968 = vadd.f32 %v184, %v967
        %v969 = vpop.f32.mrb[0].mxu0
        %970 = vmatprep.mubr.f32.mxu0 0.0
        %971 = vmatmul.mubr.f32.gmra.mrb[0].mxu0 %v851
        %v972 = vpop.f32.mrb[0].mxu0
        %v973 = vadd.f32 %v184, %v972
        %v974 = vpop.f32.mrb[0].mxu0
        %975 = vmatprep.mubr.f32.mxu0 0.0
        %976 = vmatmul.mubr.f32.gmra.mrb[0].mxu0 %v854
        %v977 = vpop.f32.mrb[0].mxu0
        %v978 = vadd.f32 %v184, %v977
        %v979 = vpop.f32.mrb[0].mxu0
        %980 = vmatprep.mubr.f32.mxu0 0.0
        %981 = vmatmul.mubr.f32.gmra.mrb[0].mxu0 %v857
        %v982 = vpop.f32.mrb[0].mxu0
        %v983 = vadd.f32 %v184, %v982
        %v984 = vpop.f32.mrb[0].mxu0
        %985 = vmatprep.mubr.f32.mxu0 0.0
        %986 = vmatmul.mubr.f32.gmra.mrb[0].mxu0 %v860
        %v987 = vpop.f32.mrb[0].mxu0
        %v988 = vadd.f32 %v184, %v987
        %v989 = vpop.f32.mrb[0].mxu0
        %990 = vmatprep.mubr.f32.mxu0 0.0
        %991 = vmatmul.mubr.f32.gmra.mrb[0].mxu0 %v863
        %v992 = vpop.f32.mrb[0].mxu0
        %v993 = vadd.f32 %v184, %v992
        %v994 = vpop.f32.mrb[0].mxu0
        %995 = vmatprep.mubr.f32.mxu0 0.0
        %996 = vmatmul.mubr.f32.gmra.mrb[0].mxu0 %v866
        %v997 = vpop.f32.mrb[0].mxu0
        %v998 = vadd.f32 %v184, %v997
        %v999 = vpop.f32.mrb[0].mxu0
        %1000 = vmatprep.mubr.f32.mxu0 0.0
        %1001 = vmatmul.mubr.f32.gmra.mrb[0].mxu0 %v869
        %v1002 = vpop.f32.mrb[0].mxu0
        %v1003 = vadd.f32 %v184, %v1002
        %v1004 = vpop.f32.mrb[0].mxu0
        %1005 = vmatprep.mubr.f32.mxu0 0.0
        %1006 = vmatmul.mubr.f32.gmra.mrb[0].mxu0 %v872
        %v1007 = vpop.f32.mrb[0].mxu0
        %v1008 = vadd.f32 %v184, %v1007
        %v1009 = vpop.f32.mrb[0].mxu0
        %1010 = vmatprep.mubr.f32.mxu0 0.0
        %1011 = vmatmul.mubr.f32.gmra.mrb[0].mxu0 %v875
        %v1012 = vpop.f32.mrb[0].mxu0
        %v1013 = vadd.f32 %v184, %v1012
        %v1014 = vpop.f32.mrb[0].mxu0
        %1015 = vmatprep.mubr.f32.mxu0 0.0
        %1016 = vmatmul.mubr.f32.gmra.mrb[0].mxu0 %v878
        %v1017 = vpop.f32.mrb[0].mxu0
        %v1018 = vadd.f32 %v184, %v1017
        %v1019 = vpop.f32.mrb[0].mxu0
        %1020 = vmatprep.mubr.f32.mxu0 0.0
        %1021 = vmatmul.mubr.f32.gmra.mrb[0].mxu0 %v881
        %v1022 = vpop.f32.mrb[0].mxu0
        %v1023 = vadd.f32 %v184, %v1022
        %v1024 = vpop.f32.mrb[0].mxu0
        %1025 = vmatprep.mubr.f32.mxu0 0.0
        %1026 = vmatmul.mubr.f32.gmra.mrb[0].mxu0 %v884
        %v1027 = vpop.f32.mrb[0].mxu0
        %v1028 = vadd.f32 %v184, %v1027
        %v1029 = vpop.f32.mrb[0].mxu0
        %1030 = vdwg.mxu0
        %v1031 = vmax.f32 %v953, 0.0
        %v1032 = vmax.f32 %v958, 0.0
        %v1033 = vmax.f32 %v963, 0.0
        %v1034 = vmax.f32 %v968, 0.0
        %v1035 = vmax.f32 %v973, 0.0
        %v1036 = vmax.f32 %v978, 0.0
        %v1037 = vmax.f32 %v983, 0.0
        %v1038 = vmax.f32 %v988, 0.0
        %v1039 = vmax.f32 %v993, 0.0
        %v1040 = vmax.f32 %v998, 0.0
        %v1041 = vmax.f32 %v1003, 0.0
        %v1042 = vmax.f32 %v1008, 0.0
        %v1043 = vmax.f32 %v1013, 0.0
        %v1044 = vmax.f32 %v1018, 0.0
        %v1045 = vmax.f32 %v1023, 0.0
        %v1046 = vmax.f32 %v1028, 0.0
        %v1047 = vrot.slane %v1031, 7
        %v1048 = vrot.slane %v1032, 7
        %v1049 = vrot.slane %v1033, 7
        %v1050 = vrot.slane %v1034, 7
        %v1051 = vrot.slane %v1035, 7
        %v1052 = vrot.slane %v1036, 7
        %v1053 = vrot.slane %v1037, 7
        %v1054 = vrot.slane %v1038, 7
        %v1055 = vrot.slane %v1039, 7
        %v1056 = vrot.slane %v1040, 7
        %v1057 = vrot.slane %v1041, 7
        %v1058 = vrot.slane %v1042, 7
        %v1059 = vrot.slane %v1043, 7
        %v1060 = vrot.slane %v1044, 7
        %v1061 = vrot.slane %v1045, 7
        %v1062 = vrot.slane %v1046, 7
        %v1063 = vsel %vm417, %v1061, %v1062
        %v1064 = vsel %vm417, %v1060, %v1061
        %v1065 = vsel %vm417, %v1059, %v1060
        %v1066 = vsel %vm417, %v1058, %v1059
        %v1067 = vsel %vm417, %v1057, %v1058
        %v1068 = vsel %vm417, %v1056, %v1057
        %v1069 = vsel %vm417, %v1055, %v1056
        %v1070 = vsel %vm417, %v1054, %v1055
        %v1071 = vsel %vm417, %v1053, %v1054
        %v1072 = vsel %vm417, %v1052, %v1053
        %v1073 = vsel %vm417, %v1051, %v1052
        %v1074 = vsel %vm417, %v1050, %v1051
        %v1075 = vsel %vm417, %v1049, %v1050
        %v1076 = vsel %vm417, %v1048, %v1049
        %v1077 = vsel %vm417, %v1047, %v1048
        %v1078 = vsel %vm417, %v1062, %v1047
        %v1079 = vadd.f32 %v1031, %v1078
        %v1080 = vadd.f32 %v1032, %v1077
        %v1081 = vadd.f32 %v1033, %v1076
        %v1082 = vadd.f32 %v1034, %v1075
        %v1083 = vadd.f32 %v1035, %v1074
        %v1084 = vadd.f32 %v1036, %v1073
        %v1085 = vadd.f32 %v1037, %v1072
        %v1086 = vadd.f32 %v1038, %v1071
        %v1087 = vadd.f32 %v1039, %v1070
        %v1088 = vadd.f32 %v1040, %v1069
        %v1089 = vadd.f32 %v1041, %v1068
        %v1090 = vadd.f32 %v1042, %v1067
        %v1091 = vadd.f32 %v1043, %v1066
        %v1092 = vadd.f32 %v1044, %v1065
        %v1093 = vadd.f32 %v1045, %v1064
        %v1094 = vadd.f32 %v1046, %v1063
        %v1095 = vrot.slane %v1031, 1
        %v1096 = vrot.slane %v1032, 1
        %v1097 = vrot.slane %v1033, 1
        %v1098 = vrot.slane %v1034, 1
        %v1099 = vrot.slane %v1035, 1
        %v1100 = vrot.slane %v1036, 1
        %v1101 = vrot.slane %v1037, 1
        %v1102 = vrot.slane %v1038, 1
        %v1103 = vrot.slane %v1039, 1
        %v1104 = vrot.slane %v1040, 1
        %v1105 = vrot.slane %v1041, 1
        %v1106 = vrot.slane %v1042, 1
        %v1107 = vrot.slane %v1043, 1
        %v1108 = vrot.slane %v1044, 1
        %v1109 = vrot.slane %v1045, 1
        %v1110 = vrot.slane %v1046, 1
        %v1111 = vsel %vm466, %v1109, %v1110
        %v1112 = vsel %vm466, %v1108, %v1109
        %v1113 = vsel %vm466, %v1107, %v1108
        %v1114 = vsel %vm466, %v1106, %v1107
        %v1115 = vsel %vm466, %v1105, %v1106
        %v1116 = vsel %vm466, %v1104, %v1105
        %v1117 = vsel %vm466, %v1103, %v1104
        %v1118 = vsel %vm466, %v1102, %v1103
        %v1119 = vsel %vm466, %v1101, %v1102
        %v1120 = vsel %vm466, %v1100, %v1101
        %v1121 = vsel %vm466, %v1099, %v1100
        %v1122 = vsel %vm466, %v1098, %v1099
        %v1123 = vsel %vm466, %v1097, %v1098
        %v1124 = vsel %vm466, %v1096, %v1097
        %v1125 = vsel %vm466, %v1095, %v1096
        %v1126 = vsel %vm466, %v1110, %v1095
        %v1127 = vadd.f32 %v1079, %v1125
        %v1128 = vadd.f32 %v1080, %v1124
        %v1129 = vadd.f32 %v1081, %v1123
        %v1130 = vadd.f32 %v1082, %v1122
        %v1131 = vadd.f32 %v1083, %v1121
        %v1132 = vadd.f32 %v1084, %v1120
        %v1133 = vadd.f32 %v1085, %v1119
        %v1134 = vadd.f32 %v1086, %v1118
        %v1135 = vadd.f32 %v1087, %v1117
        %v1136 = vadd.f32 %v1088, %v1116
        %v1137 = vadd.f32 %v1089, %v1115
        %v1138 = vadd.f32 %v1090, %v1114
        %v1139 = vadd.f32 %v1091, %v1113
        %v1140 = vadd.f32 %v1092, %v1112
        %v1141 = vadd.f32 %v1093, %v1111
        %v1142 = vadd.f32 %v1094, %v1126
        %s1143 = scalar_lea.vmem %s145, 384
        %v1144 = vld [vmem:[%s1143] sm:$0xff]
        %v1145 = vld [vmem:[%s1143 + $0x8] sm:$0xff]
        %v1146 = vld [vmem:[%s1143 + $0x10] sm:$0xff]
        %v1147 = vld [vmem:[%s1143 + $0x18] sm:$0xff]
        %v1148 = vld [vmem:[%s1143 + $0x20] sm:$0xff]
        %v1149 = vld [vmem:[%s1143 + $0x28] sm:$0xff]
        %v1150 = vld [vmem:[%s1143 + $0x30] sm:$0xff]
        %v1151 = vld [vmem:[%s1143 + $0x38] sm:$0xff]
        %v1152 = vld [vmem:[%s1143 + $0x40] sm:$0xff]
        %v1153 = vld [vmem:[%s1143 + $0x48] sm:$0xff]
        %v1154 = vld [vmem:[%s1143 + $0x50] sm:$0xff]
        %v1155 = vld [vmem:[%s1143 + $0x58] sm:$0xff]
        %v1156 = vld [vmem:[%s1143 + $0x60] sm:$0xff]
        %v1157 = vld [vmem:[%s1143 + $0x68] sm:$0xff]
        %v1158 = vld [vmem:[%s1143 + $0x70] sm:$0xff]
        %v1159 = vld [vmem:[%s1143 + $0x78] sm:$0xff]
        %v1161 = vsel %vm185, %v1144, 0
        %v1164 = vsel %vm185, %v1145, 0
        %v1167 = vsel %vm185, %v1146, 0
        %v1170 = vsel %vm185, %v1147, 0
        %v1173 = vsel %vm185, %v1148, 0
        %v1176 = vsel %vm185, %v1149, 0
        %v1179 = vsel %vm185, %v1150, 0
        %v1182 = vsel %vm185, %v1151, 0
        %v1185 = vsel %vm185, %v1152, 0
        %v1188 = vsel %vm185, %v1153, 0
        %v1191 = vsel %vm185, %v1154, 0
        %v1194 = vsel %vm185, %v1155, 0
        %v1197 = vsel %vm185, %v1156, 0
        %v1200 = vsel %vm185, %v1157, 0
        %v1203 = vsel %vm185, %v1158, 0
        %v1206 = vsel %vm185, %v1159, 0
        %1208 = vmatprep.subr.mxu0 0.0
        %1209 = vmatpush1.msra.mxu0 %v147
        %1210 = vmatprep.subr.mxu0 0.0
        %1211 = vmatpush1.msra.mxu0 %v236
        %1212 = vmatprep.subr.mxu0 0.0
        %1213 = vmatpush1.msra.mxu0 0.0
        %1214 = vmatprep.subr.mxu0 0.0
        %1215 = vmatpush1.msra.mxu0 0.0
        %1216 = vmatprep.subr.mxu0 0.0
        %1217 = vmatpush1.msra.mxu0 0.0
        %1218 = vmatprep.subr.mxu0 0.0
        %1219 = vmatpush1.msra.mxu0 0.0
        %1220 = vmatprep.subr.mxu0 0.0
        %1221 = vmatpush1.msra.mxu0 0.0
        %1222 = vmatprep.subr.mxu0 0.0
        %1223 = vmatpush1.msra.mxu0 0.0
        %1224 = vmatprep.subr.mxu0 0.0
        %1225 = vmatpush1.msra.mxu0 0.0
        %1226 = vmatprep.subr.mxu0 0.0
        %1227 = vmatpush1.msra.mxu0 0.0
        %1228 = vmatprep.subr.mxu0 0.0
        %1229 = vmatpush1.msra.mxu0 0.0
        %1230 = vmatprep.subr.mxu0 0.0
        %1231 = vmatpush1.msra.mxu0 0.0
        %1232 = vmatprep.subr.mxu0 0.0
        %1233 = vmatpush1.msra.mxu0 0.0
        %1234 = vmatprep.subr.mxu0 0.0
        %1235 = vmatpush1.msra.mxu0 0.0
        %1236 = vmatprep.subr.mxu0 0.0
        %1237 = vmatpush1.msra.mxu0 0.0
        %1238 = vmatprep.subr.mxu0 0.0
        %1239 = vmatpush1.msra.mxu0 0.0
        %1240 = vmatprep.subr.mxu0 0.0
        %1241 = vmatpush1.msra.mxu0 0.0
        %1242 = vmatprep.subr.mxu0 0.0
        %1243 = vmatpush1.msra.mxu0 0.0
        %1244 = vmatprep.subr.mxu0 0.0
        %1245 = vmatpush1.msra.mxu0 0.0
        %1246 = vmatprep.subr.mxu0 0.0
        %1247 = vmatpush1.msra.mxu0 0.0
        %1248 = vmatprep.subr.mxu0 0.0
        %1249 = vmatpush1.msra.mxu0 0.0
        %1250 = vmatprep.subr.mxu0 0.0
        %1251 = vmatpush1.msra.mxu0 0.0
        %1252 = vmatprep.subr.mxu0 0.0
        %1253 = vmatpush1.msra.mxu0 0.0
        %1254 = vmatprep.subr.mxu0 0.0
        %1255 = vmatpush1.msra.mxu0 0.0
        %1256 = vmatprep.subr.mxu0 0.0
        %1257 = vmatpush1.msra.mxu0 0.0
        %1258 = vmatprep.subr.mxu0 0.0
        %1259 = vmatpush1.msra.mxu0 0.0
        %1260 = vmatprep.subr.mxu0 0.0
        %1261 = vmatpush1.msra.mxu0 0.0
        %1262 = vmatprep.subr.mxu0 0.0
        %1263 = vmatpush1.msra.mxu0 0.0
        %1264 = vmatprep.subr.mxu0 0.0
        %1265 = vmatpush1.msra.mxu0 0.0
        %1266 = vmatprep.subr.mxu0 0.0
        %1267 = vmatpush1.msra.mxu0 0.0
        %1268 = vmatprep.subr.mxu0 0.0
        %1269 = vmatpush1.msra.mxu0 0.0
        %1270 = vmatprep.subr.mxu0 0.0
        %1271 = vmatpush1.msra.mxu0 0.0
        %1272 = vmatprep.mubr.f32.mxu0 0.0
        %1273 = vmatmul.mubr.f32.gmra.mrb[0].mxu0 %v1161
        %v1274 = vpop.f32.mrb[0].mxu0
        %v1275 = vadd.f32 %v184, %v1274
        %v1276 = vpop.f32.mrb[0].mxu0
        %1277 = vmatprep.mubr.f32.mxu0 0.0
        %1278 = vmatmul.mubr.f32.gmra.mrb[0].mxu0 %v1164
        %v1279 = vpop.f32.mrb[0].mxu0
        %v1280 = vadd.f32 %v184, %v1279
        %v1281 = vpop.f32.mrb[0].mxu0
        %1282 = vmatprep.mubr.f32.mxu0 0.0
        %1283 = vmatmul.mubr.f32.gmra.mrb[0].mxu0 %v1167
        %v1284 = vpop.f32.mrb[0].mxu0
        %v1285 = vadd.f32 %v184, %v1284
        %v1286 = vpop.f32.mrb[0].mxu0
        %1287 = vmatprep.mubr.f32.mxu0 0.0
        %1288 = vmatmul.mubr.f32.gmra.mrb[0].mxu0 %v1170
        %v1289 = vpop.f32.mrb[0].mxu0
        %v1290 = vadd.f32 %v184, %v1289
        %v1291 = vpop.f32.mrb[0].mxu0
        %1292 = vmatprep.mubr.f32.mxu0 0.0
        %1293 = vmatmul.mubr.f32.gmra.mrb[0].mxu0 %v1173
        %v1294 = vpop.f32.mrb[0].mxu0
        %v1295 = vadd.f32 %v184, %v1294
        %v1296 = vpop.f32.mrb[0].mxu0
        %1297 = vmatprep.mubr.f32.mxu0 0.0
        %1298 = vmatmul.mubr.f32.gmra.mrb[0].mxu0 %v1176
        %v1299 = vpop.f32.mrb[0].mxu0
        %v1300 = vadd.f32 %v184, %v1299
        %v1301 = vpop.f32.mrb[0].mxu0
        %1302 = vmatprep.mubr.f32.mxu0 0.0
        %1303 = vmatmul.mubr.f32.gmra.mrb[0].mxu0 %v1179
        %v1304 = vpop.f32.mrb[0].mxu0
        %v1305 = vadd.f32 %v184, %v1304
        %v1306 = vpop.f32.mrb[0].mxu0
        %1307 = vmatprep.mubr.f32.mxu0 0.0
        %1308 = vmatmul.mubr.f32.gmra.mrb[0].mxu0 %v1182
        %v1309 = vpop.f32.mrb[0].mxu0
        %v1310 = vadd.f32 %v184, %v1309
        %v1311 = vpop.f32.mrb[0].mxu0
        %1312 = vmatprep.mubr.f32.mxu0 0.0
        %1313 = vmatmul.mubr.f32.gmra.mrb[0].mxu0 %v1185
        %v1314 = vpop.f32.mrb[0].mxu0
        %v1315 = vadd.f32 %v184, %v1314
        %v1316 = vpop.f32.mrb[0].mxu0
        %1317 = vmatprep.mubr.f32.mxu0 0.0
        %1318 = vmatmul.mubr.f32.gmra.mrb[0].mxu0 %v1188
        %v1319 = vpop.f32.mrb[0].mxu0
        %v1320 = vadd.f32 %v184, %v1319
        %v1321 = vpop.f32.mrb[0].mxu0
        %1322 = vmatprep.mubr.f32.mxu0 0.0
        %1323 = vmatmul.mubr.f32.gmra.mrb[0].mxu0 %v1191
        %v1324 = vpop.f32.mrb[0].mxu0
        %v1325 = vadd.f32 %v184, %v1324
        %v1326 = vpop.f32.mrb[0].mxu0
        %1327 = vmatprep.mubr.f32.mxu0 0.0
        %1328 = vmatmul.mubr.f32.gmra.mrb[0].mxu0 %v1194
        %v1329 = vpop.f32.mrb[0].mxu0
        %v1330 = vadd.f32 %v184, %v1329
        %v1331 = vpop.f32.mrb[0].mxu0
        %1332 = vmatprep.mubr.f32.mxu0 0.0
        %1333 = vmatmul.mubr.f32.gmra.mrb[0].mxu0 %v1197
        %v1334 = vpop.f32.mrb[0].mxu0
        %v1335 = vadd.f32 %v184, %v1334
        %v1336 = vpop.f32.mrb[0].mxu0
        %1337 = vmatprep.mubr.f32.mxu0 0.0
        %1338 = vmatmul.mubr.f32.gmra.mrb[0].mxu0 %v1200
        %v1339 = vpop.f32.mrb[0].mxu0
        %v1340 = vadd.f32 %v184, %v1339
        %v1341 = vpop.f32.mrb[0].mxu0
        %1342 = vmatprep.mubr.f32.mxu0 0.0
        %1343 = vmatmul.mubr.f32.gmra.mrb[0].mxu0 %v1203
        %v1344 = vpop.f32.mrb[0].mxu0
        %v1345 = vadd.f32 %v184, %v1344
        %v1346 = vpop.f32.mrb[0].mxu0
        %1347 = vmatprep.mubr.f32.mxu0 0.0
        %1348 = vmatmul.mubr.f32.gmra.mrb[0].mxu0 %v1206
        %v1349 = vpop.f32.mrb[0].mxu0
        %v1350 = vadd.f32 %v184, %v1349
        %v1351 = vpop.f32.mrb[0].mxu0
        %1352 = vdwg.mxu0
        %v1353 = vmax.f32 %v1275, 0.0
        %v1354 = vmax.f32 %v1280, 0.0
        %v1355 = vmax.f32 %v1285, 0.0
        %v1356 = vmax.f32 %v1290, 0.0
        %v1357 = vmax.f32 %v1295, 0.0
        %v1358 = vmax.f32 %v1300, 0.0
        %v1359 = vmax.f32 %v1305, 0.0
        %v1360 = vmax.f32 %v1310, 0.0
        %v1361 = vmax.f32 %v1315, 0.0
        %v1362 = vmax.f32 %v1320, 0.0
        %v1363 = vmax.f32 %v1325, 0.0
        %v1364 = vmax.f32 %v1330, 0.0
        %v1365 = vmax.f32 %v1335, 0.0
        %v1366 = vmax.f32 %v1340, 0.0
        %v1367 = vmax.f32 %v1345, 0.0
        %v1368 = vmax.f32 %v1350, 0.0
        %v1369 = vrot.slane %v1353, 7
        %v1370 = vrot.slane %v1354, 7
        %v1371 = vrot.slane %v1355, 7
        %v1372 = vrot.slane %v1356, 7
        %v1373 = vrot.slane %v1357, 7
        %v1374 = vrot.slane %v1358, 7
        %v1375 = vrot.slane %v1359, 7
        %v1376 = vrot.slane %v1360, 7
        %v1377 = vrot.slane %v1361, 7
        %v1378 = vrot.slane %v1362, 7
        %v1379 = vrot.slane %v1363, 7
        %v1380 = vrot.slane %v1364, 7
        %v1381 = vrot.slane %v1365, 7
        %v1382 = vrot.slane %v1366, 7
        %v1383 = vrot.slane %v1367, 7
        %v1384 = vrot.slane %v1368, 7
        %v1385 = vsel %vm417, %v1383, %v1384
        %v1386 = vsel %vm417, %v1382, %v1383
        %v1387 = vsel %vm417, %v1381, %v1382
        %v1388 = vsel %vm417, %v1380, %v1381
        %v1389 = vsel %vm417, %v1379, %v1380
        %v1390 = vsel %vm417, %v1378, %v1379
        %v1391 = vsel %vm417, %v1377, %v1378
        %v1392 = vsel %vm417, %v1376, %v1377
        %v1393 = vsel %vm417, %v1375, %v1376
        %v1394 = vsel %vm417, %v1374, %v1375
        %v1395 = vsel %vm417, %v1373, %v1374
        %v1396 = vsel %vm417, %v1372, %v1373
        %v1397 = vsel %vm417, %v1371, %v1372
        %v1398 = vsel %vm417, %v1370, %v1371
        %v1399 = vsel %vm417, %v1369, %v1370
        %v1400 = vsel %vm417, %v1384, %v1369
        %v1401 = vadd.f32 %v1353, %v1400
        %v1402 = vadd.f32 %v1354, %v1399
        %v1403 = vadd.f32 %v1355, %v1398
        %v1404 = vadd.f32 %v1356, %v1397
        %v1405 = vadd.f32 %v1357, %v1396
        %v1406 = vadd.f32 %v1358, %v1395
        %v1407 = vadd.f32 %v1359, %v1394
        %v1408 = vadd.f32 %v1360, %v1393
        %v1409 = vadd.f32 %v1361, %v1392
        %v1410 = vadd.f32 %v1362, %v1391
        %v1411 = vadd.f32 %v1363, %v1390
        %v1412 = vadd.f32 %v1364, %v1389
        %v1413 = vadd.f32 %v1365, %v1388
        %v1414 = vadd.f32 %v1366, %v1387
        %v1415 = vadd.f32 %v1367, %v1386
        %v1416 = vadd.f32 %v1368, %v1385
        %v1417 = vrot.slane %v1353, 1
        %v1418 = vrot.slane %v1354, 1
        %v1419 = vrot.slane %v1355, 1
        %v1420 = vrot.slane %v1356, 1
        %v1421 = vrot.slane %v1357, 1
        %v1422 = vrot.slane %v1358, 1
        %v1423 = vrot.slane %v1359, 1
        %v1424 = vrot.slane %v1360, 1
        %v1425 = vrot.slane %v1361, 1
        %v1426 = vrot.slane %v1362, 1
        %v1427 = vrot.slane %v1363, 1
        %v1428 = vrot.slane %v1364, 1
        %v1429 = vrot.slane %v1365, 1
        %v1430 = vrot.slane %v1366, 1
        %v1431 = vrot.slane %v1367, 1
        %v1432 = vrot.slane %v1368, 1
        %v1433 = vsel %vm466, %v1431, %v1432
        %v1434 = vsel %vm466, %v1430, %v1431
        %v1435 = vsel %vm466, %v1429, %v1430
        %v1436 = vsel %vm466, %v1428, %v1429
        %v1437 = vsel %vm466, %v1427, %v1428
        %v1438 = vsel %vm466, %v1426, %v1427
        %v1439 = vsel %vm466, %v1425, %v1426
        %v1440 = vsel %vm466, %v1424, %v1425
        %v1441 = vsel %vm466, %v1423, %v1424
        %v1442 = vsel %vm466, %v1422, %v1423
        %v1443 = vsel %vm466, %v1421, %v1422
        %v1444 = vsel %vm466, %v1420, %v1421
        %v1445 = vsel %vm466, %v1419, %v1420
        %v1446 = vsel %vm466, %v1418, %v1419
        %v1447 = vsel %vm466, %v1417, %v1418
        %v1448 = vsel %vm466, %v1432, %v1417
        %v1449 = vadd.f32 %v1401, %v1447
        %v1450 = vadd.f32 %v1402, %v1446
        %v1451 = vadd.f32 %v1403, %v1445
        %v1452 = vadd.f32 %v1404, %v1444
        %v1453 = vadd.f32 %v1405, %v1443
        %v1454 = vadd.f32 %v1406, %v1442
        %v1455 = vadd.f32 %v1407, %v1441
        %v1456 = vadd.f32 %v1408, %v1440
        %v1457 = vadd.f32 %v1409, %v1439
        %v1458 = vadd.f32 %v1410, %v1438
        %v1459 = vadd.f32 %v1411, %v1437
        %v1460 = vadd.f32 %v1412, %v1436
        %v1461 = vadd.f32 %v1413, %v1435
        %v1462 = vadd.f32 %v1414, %v1434
        %v1463 = vadd.f32 %v1415, %v1433
        %v1464 = vadd.f32 %v1416, %v1448
        %v1465 = vlaneseq
        %v1466 = vshrl.u32 %v1465, 7
        %v1467 = vsub.s32 0, %v1466
        %v1468 = vrot.slane %v162, %v1467
        %vm1469 = vcmask 261120
        %v1471 = vsel %vm1469, %v483, 0
        %v1474 = vsel %vm1469, %v484, 0
        %v1477 = vsel %vm1469, %v485, 0
        %v1480 = vsel %vm1469, %v486, 0
        %v1483 = vsel %vm1469, %v487, 0
        %v1486 = vsel %vm1469, %v488, 0
        %v1489 = vsel %vm1469, %v489, 0
        %v1492 = vsel %vm1469, %v490, 0
        %v1495 = vsel %vm1469, %v491, 0
        %v1498 = vsel %vm1469, %v492, 0
        %v1501 = vsel %vm1469, %v493, 0
        %v1504 = vsel %vm1469, %v494, 0
        %v1507 = vsel %vm1469, %v495, 0
        %v1510 = vsel %vm1469, %v496, 0
        %v1513 = vsel %vm1469, %v497, 0
        %v1516 = vsel %vm1469, %v498, 0
        %v1519 = vsel %vm1469, %v805, 0
        %v1522 = vsel %vm1469, %v806, 0
        %v1525 = vsel %vm1469, %v807, 0
        %v1528 = vsel %vm1469, %v808, 0
        %v1531 = vsel %vm1469, %v809, 0
        %v1534 = vsel %vm1469, %v810, 0
        %v1537 = vsel %vm1469, %v811, 0
        %v1540 = vsel %vm1469, %v812, 0
        %v1543 = vsel %vm1469, %v813, 0
        %v1546 = vsel %vm1469, %v814, 0
        %v1549 = vsel %vm1469, %v815, 0
        %v1552 = vsel %vm1469, %v816, 0
        %v1555 = vsel %vm1469, %v817, 0
        %v1558 = vsel %vm1469, %v818, 0
        %v1561 = vsel %vm1469, %v819, 0
        %v1564 = vsel %vm1469, %v820, 0
        %v1567 = vsel %vm1469, %v1127, 0
        %v1570 = vsel %vm1469, %v1128, 0
        %v1573 = vsel %vm1469, %v1129, 0
        %v1576 = vsel %vm1469, %v1130, 0
        %v1579 = vsel %vm1469, %v1131, 0
        %v1582 = vsel %vm1469, %v1132, 0
        %v1585 = vsel %vm1469, %v1133, 0
        %v1588 = vsel %vm1469, %v1134, 0
        %v1591 = vsel %vm1469, %v1135, 0
        %v1594 = vsel %vm1469, %v1136, 0
        %v1597 = vsel %vm1469, %v1137, 0
        %v1600 = vsel %vm1469, %v1138, 0
        %v1603 = vsel %vm1469, %v1139, 0
        %v1606 = vsel %vm1469, %v1140, 0
        %v1609 = vsel %vm1469, %v1141, 0
        %v1612 = vsel %vm1469, %v1142, 0
        %v1615 = vsel %vm1469, %v1449, 0
        %v1618 = vsel %vm1469, %v1450, 0
        %v1621 = vsel %vm1469, %v1451, 0
        %v1624 = vsel %vm1469, %v1452, 0
        %v1627 = vsel %vm1469, %v1453, 0
        %v1630 = vsel %vm1469, %v1454, 0
        %v1633 = vsel %vm1469, %v1455, 0
        %v1636 = vsel %vm1469, %v1456, 0
        %v1639 = vsel %vm1469, %v1457, 0
        %v1642 = vsel %vm1469, %v1458, 0
        %v1645 = vsel %vm1469, %v1459, 0
        %v1648 = vsel %vm1469, %v1460, 0
        %v1651 = vsel %vm1469, %v1461, 0
        %v1654 = vsel %vm1469, %v1462, 0
        %v1657 = vsel %vm1469, %v1463, 0
        %v1660 = vsel %vm1469, %v1464, 0
        %1662 = vmatprep.subr.mxu0 0.0
        %1663 = vmatpush1.msra.mxu0 %v149
        %1664 = vmatprep.subr.mxu0 0.0
        %1665 = vmatpush1.msra.mxu0 %v150
        %1666 = vmatprep.subr.mxu0 0.0
        %1667 = vmatpush1.msra.mxu0 %v151
        %1668 = vmatprep.subr.mxu0 0.0
        %1669 = vmatpush1.msra.mxu0 %v152
        %1670 = vmatprep.subr.mxu0 0.0
        %1671 = vmatpush1.msra.mxu0 0.0
        %1672 = vmatprep.subr.mxu0 0.0
        %1673 = vmatpush1.msra.mxu0 0.0
        %1674 = vmatprep.subr.mxu0 0.0
        %1675 = vmatpush1.msra.mxu0 0.0
        %1676 = vmatprep.subr.mxu0 0.0
        %1677 = vmatpush1.msra.mxu0 0.0
        %1678 = vmatprep.subr.mxu0 0.0
        %1679 = vmatpush1.msra.mxu0 0.0
        %1680 = vmatprep.subr.mxu0 0.0
        %1681 = vmatpush1.msra.mxu0 0.0
        %1682 = vmatprep.subr.mxu0 0.0
        %1683 = vmatpush1.msra.mxu0 0.0
        %1684 = vmatprep.subr.mxu0 0.0
        %1685 = vmatpush1.msra.mxu0 0.0
        %1686 = vmatprep.subr.mxu0 0.0
        %1687 = vmatpush1.msra.mxu0 0.0
        %1688 = vmatprep.subr.mxu0 0.0
        %1689 = vmatpush1.msra.mxu0 0.0
        %1690 = vmatprep.subr.mxu0 0.0
        %1691 = vmatpush1.msra.mxu0 0.0
        %1692 = vmatprep.subr.mxu0 0.0
        %1693 = vmatpush1.msra.mxu0 0.0
        %1694 = vmatprep.subr.mxu0 0.0
        %1695 = vmatpush1.msra.mxu0 0.0
        %1696 = vmatprep.subr.mxu0 0.0
        %1697 = vmatpush1.msra.mxu0 0.0
        %1698 = vmatprep.subr.mxu0 0.0
        %1699 = vmatpush1.msra.mxu0 0.0
        %1700 = vmatprep.subr.mxu0 0.0
        %1701 = vmatpush1.msra.mxu0 0.0
        %1702 = vmatprep.subr.mxu0 0.0
        %1703 = vmatpush1.msra.mxu0 0.0
        %1704 = vmatprep.subr.mxu0 0.0
        %1705 = vmatpush1.msra.mxu0 0.0
        %1706 = vmatprep.subr.mxu0 0.0
        %1707 = vmatpush1.msra.mxu0 0.0
        %1708 = vmatprep.subr.mxu0 0.0
        %1709 = vmatpush1.msra.mxu0 0.0
        %1710 = vmatprep.subr.mxu0 0.0
        %1711 = vmatpush1.msra.mxu0 0.0
        %1712 = vmatprep.subr.mxu0 0.0
        %1713 = vmatpush1.msra.mxu0 0.0
        %1714 = vmatprep.subr.mxu0 0.0
        %1715 = vmatpush1.msra.mxu0 0.0
        %1716 = vmatprep.subr.mxu0 0.0
        %1717 = vmatpush1.msra.mxu0 0.0
        %1718 = vmatprep.subr.mxu0 0.0
        %1719 = vmatpush1.msra.mxu0 0.0
        %1720 = vmatprep.subr.mxu0 0.0
        %1721 = vmatpush1.msra.mxu0 0.0
        %1722 = vmatprep.subr.mxu0 0.0
        %1723 = vmatpush1.msra.mxu0 0.0
        %1724 = vmatprep.subr.mxu0 0.0
        %1725 = vmatpush1.msra.mxu0 0.0
        %1726 = vmatprep.mubr.f32.mxu0 0.0
        %1727 = vmatmul.mubr.f32.gmra.mrb[0].mxu0 %v1471
        %v1728 = vpop.f32.mrb[0].mxu0
        %v1729 = vadd.f32 %v1468, %v1728
        %v1730 = vpop.f32.mrb[0].mxu0
        %1731 = vmatprep.mubr.f32.mxu0 0.0
        %1732 = vmatmul.mubr.f32.gmra.mrb[0].mxu0 %v1474
        %v1733 = vpop.f32.mrb[0].mxu0
        %v1734 = vadd.f32 %v1468, %v1733
        %v1735 = vpop.f32.mrb[0].mxu0
        %1736 = vmatprep.mubr.f32.mxu0 0.0
        %1737 = vmatmul.mubr.f32.gmra.mrb[0].mxu0 %v1477
        %v1738 = vpop.f32.mrb[0].mxu0
        %v1739 = vadd.f32 %v1468, %v1738
        %v1740 = vpop.f32.mrb[0].mxu0
        %1741 = vmatprep.mubr.f32.mxu0 0.0
        %1742 = vmatmul.mubr.f32.gmra.mrb[0].mxu0 %v1480
        %v1743 = vpop.f32.mrb[0].mxu0
        %v1744 = vadd.f32 %v1468, %v1743
        %v1745 = vpop.f32.mrb[0].mxu0
        %1746 = vmatprep.mubr.f32.mxu0 0.0
        %1747 = vmatmul.mubr.f32.gmra.mrb[0].mxu0 %v1483
        %v1748 = vpop.f32.mrb[0].mxu0
        %v1749 = vadd.f32 %v1468, %v1748
        %v1750 = vpop.f32.mrb[0].mxu0
        %1751 = vmatprep.mubr.f32.mxu0 0.0
        %1752 = vmatmul.mubr.f32.gmra.mrb[0].mxu0 %v1486
        %v1753 = vpop.f32.mrb[0].mxu0
        %v1754 = vadd.f32 %v1468, %v1753
        %v1755 = vpop.f32.mrb[0].mxu0
        %1756 = vmatprep.mubr.f32.mxu0 0.0
        %1757 = vmatmul.mubr.f32.gmra.mrb[0].mxu0 %v1489
        %v1758 = vpop.f32.mrb[0].mxu0
        %v1759 = vadd.f32 %v1468, %v1758
        %v1760 = vpop.f32.mrb[0].mxu0
        %1761 = vmatprep.mubr.f32.mxu0 0.0
        %1762 = vmatmul.mubr.f32.gmra.mrb[0].mxu0 %v1492
        %v1763 = vpop.f32.mrb[0].mxu0
        %v1764 = vadd.f32 %v1468, %v1763
        %v1765 = vpop.f32.mrb[0].mxu0
        %1766 = vmatprep.mubr.f32.mxu0 0.0
        %1767 = vmatmul.mubr.f32.gmra.mrb[0].mxu0 %v1495
        %v1768 = vpop.f32.mrb[0].mxu0
        %v1769 = vadd.f32 %v1468, %v1768
        %v1770 = vpop.f32.mrb[0].mxu0
        %1771 = vmatprep.mubr.f32.mxu0 0.0
        %1772 = vmatmul.mubr.f32.gmra.mrb[0].mxu0 %v1498
        %v1773 = vpop.f32.mrb[0].mxu0
        %v1774 = vadd.f32 %v1468, %v1773
        %v1775 = vpop.f32.mrb[0].mxu0
        %1776 = vmatprep.mubr.f32.mxu0 0.0
        %1777 = vmatmul.mubr.f32.gmra.mrb[0].mxu0 %v1501
        %v1778 = vpop.f32.mrb[0].mxu0
        %v1779 = vadd.f32 %v1468, %v1778
        %v1780 = vpop.f32.mrb[0].mxu0
        %1781 = vmatprep.mubr.f32.mxu0 0.0
        %1782 = vmatmul.mubr.f32.gmra.mrb[0].mxu0 %v1504
        %v1783 = vpop.f32.mrb[0].mxu0
        %v1784 = vadd.f32 %v1468, %v1783
        %v1785 = vpop.f32.mrb[0].mxu0
        %1786 = vmatprep.mubr.f32.mxu0 0.0
        %1787 = vmatmul.mubr.f32.gmra.mrb[0].mxu0 %v1507
        %v1788 = vpop.f32.mrb[0].mxu0
        %v1789 = vadd.f32 %v1468, %v1788
        %v1790 = vpop.f32.mrb[0].mxu0
        %1791 = vmatprep.mubr.f32.mxu0 0.0
        %1792 = vmatmul.mubr.f32.gmra.mrb[0].mxu0 %v1510
        %v1793 = vpop.f32.mrb[0].mxu0
        %v1794 = vadd.f32 %v1468, %v1793
        %v1795 = vpop.f32.mrb[0].mxu0
        %1796 = vmatprep.mubr.f32.mxu0 0.0
        %1797 = vmatmul.mubr.f32.gmra.mrb[0].mxu0 %v1513
        %v1798 = vpop.f32.mrb[0].mxu0
        %v1799 = vadd.f32 %v1468, %v1798
        %v1800 = vpop.f32.mrb[0].mxu0
        %1801 = vmatprep.mubr.f32.mxu0 0.0
        %1802 = vmatmul.mubr.f32.gmra.mrb[0].mxu0 %v1516
        %v1803 = vpop.f32.mrb[0].mxu0
        %v1804 = vadd.f32 %v1468, %v1803
        %v1805 = vpop.f32.mrb[0].mxu0
        %1806 = vmatprep.mubr.f32.mxu0 0.0
        %1807 = vmatmul.mubr.f32.gmra.mrb[0].mxu0 %v1519
        %v1808 = vpop.f32.mrb[0].mxu0
        %v1809 = vadd.f32 %v1468, %v1808
        %v1810 = vpop.f32.mrb[0].mxu0
        %1811 = vmatprep.mubr.f32.mxu0 0.0
        %1812 = vmatmul.mubr.f32.gmra.mrb[0].mxu0 %v1522
        %v1813 = vpop.f32.mrb[0].mxu0
        %v1814 = vadd.f32 %v1468, %v1813
        %v1815 = vpop.f32.mrb[0].mxu0
        %1816 = vmatprep.mubr.f32.mxu0 0.0
        %1817 = vmatmul.mubr.f32.gmra.mrb[0].mxu0 %v1525
        %v1818 = vpop.f32.mrb[0].mxu0
        %v1819 = vadd.f32 %v1468, %v1818
        %v1820 = vpop.f32.mrb[0].mxu0
        %1821 = vmatprep.mubr.f32.mxu0 0.0
        %1822 = vmatmul.mubr.f32.gmra.mrb[0].mxu0 %v1528
        %v1823 = vpop.f32.mrb[0].mxu0
        %v1824 = vadd.f32 %v1468, %v1823
        %v1825 = vpop.f32.mrb[0].mxu0
        %1826 = vmatprep.mubr.f32.mxu0 0.0
        %1827 = vmatmul.mubr.f32.gmra.mrb[0].mxu0 %v1531
        %v1828 = vpop.f32.mrb[0].mxu0
        %v1829 = vadd.f32 %v1468, %v1828
        %v1830 = vpop.f32.mrb[0].mxu0
        %1831 = vmatprep.mubr.f32.mxu0 0.0
        %1832 = vmatmul.mubr.f32.gmra.mrb[0].mxu0 %v1534
        %v1833 = vpop.f32.mrb[0].mxu0
        %v1834 = vadd.f32 %v1468, %v1833
        %v1835 = vpop.f32.mrb[0].mxu0
        %1836 = vmatprep.mubr.f32.mxu0 0.0
        %1837 = vmatmul.mubr.f32.gmra.mrb[0].mxu0 %v1537
        %v1838 = vpop.f32.mrb[0].mxu0
        %v1839 = vadd.f32 %v1468, %v1838
        %v1840 = vpop.f32.mrb[0].mxu0
        %1841 = vmatprep.mubr.f32.mxu0 0.0
        %1842 = vmatmul.mubr.f32.gmra.mrb[0].mxu0 %v1540
        %v1843 = vpop.f32.mrb[0].mxu0
        %v1844 = vadd.f32 %v1468, %v1843
        %v1845 = vpop.f32.mrb[0].mxu0
        %1846 = vmatprep.mubr.f32.mxu0 0.0
        %1847 = vmatmul.mubr.f32.gmra.mrb[0].mxu0 %v1543
        %v1848 = vpop.f32.mrb[0].mxu0
        %v1849 = vadd.f32 %v1468, %v1848
        %v1850 = vpop.f32.mrb[0].mxu0
        %1851 = vmatprep.mubr.f32.mxu0 0.0
        %1852 = vmatmul.mubr.f32.gmra.mrb[0].mxu0 %v1546
        %v1853 = vpop.f32.mrb[0].mxu0
        %v1854 = vadd.f32 %v1468, %v1853
        %v1855 = vpop.f32.mrb[0].mxu0
        %1856 = vmatprep.mubr.f32.mxu0 0.0
        %1857 = vmatmul.mubr.f32.gmra.mrb[0].mxu0 %v1549
        %v1858 = vpop.f32.mrb[0].mxu0
        %v1859 = vadd.f32 %v1468, %v1858
        %v1860 = vpop.f32.mrb[0].mxu0
        %1861 = vmatprep.mubr.f32.mxu0 0.0
        %1862 = vmatmul.mubr.f32.gmra.mrb[0].mxu0 %v1552
        %v1863 = vpop.f32.mrb[0].mxu0
        %v1864 = vadd.f32 %v1468, %v1863
        %v1865 = vpop.f32.mrb[0].mxu0
        %1866 = vmatprep.mubr.f32.mxu0 0.0
        %1867 = vmatmul.mubr.f32.gmra.mrb[0].mxu0 %v1555
        %v1868 = vpop.f32.mrb[0].mxu0
        %v1869 = vadd.f32 %v1468, %v1868
        %v1870 = vpop.f32.mrb[0].mxu0
        %1871 = vmatprep.mubr.f32.mxu0 0.0
        %1872 = vmatmul.mubr.f32.gmra.mrb[0].mxu0 %v1558
        %v1873 = vpop.f32.mrb[0].mxu0
        %v1874 = vadd.f32 %v1468, %v1873
        %v1875 = vpop.f32.mrb[0].mxu0
        %1876 = vmatprep.mubr.f32.mxu0 0.0
        %1877 = vmatmul.mubr.f32.gmra.mrb[0].mxu0 %v1561
        %v1878 = vpop.f32.mrb[0].mxu0
        %v1879 = vadd.f32 %v1468, %v1878
        %v1880 = vpop.f32.mrb[0].mxu0
        %1881 = vmatprep.mubr.f32.mxu0 0.0
        %1882 = vmatmul.mubr.f32.gmra.mrb[0].mxu0 %v1564
        %v1883 = vpop.f32.mrb[0].mxu0
        %v1884 = vadd.f32 %v1468, %v1883
        %v1885 = vpop.f32.mrb[0].mxu0
        %1886 = vmatprep.mubr.f32.mxu0 0.0
        %1887 = vmatmul.mubr.f32.gmra.mrb[0].mxu0 %v1567
        %v1888 = vpop.f32.mrb[0].mxu0
        %v1889 = vadd.f32 %v1468, %v1888
        %v1890 = vpop.f32.mrb[0].mxu0
        %1891 = vmatprep.mubr.f32.mxu0 0.0
        %1892 = vmatmul.mubr.f32.gmra.mrb[0].mxu0 %v1570
        %v1893 = vpop.f32.mrb[0].mxu0
        %v1894 = vadd.f32 %v1468, %v1893
        %v1895 = vpop.f32.mrb[0].mxu0
        %1896 = vmatprep.mubr.f32.mxu0 0.0
        %1897 = vmatmul.mubr.f32.gmra.mrb[0].mxu0 %v1573
        %v1898 = vpop.f32.mrb[0].mxu0
        %v1899 = vadd.f32 %v1468, %v1898
        %v1900 = vpop.f32.mrb[0].mxu0
        %1901 = vmatprep.mubr.f32.mxu0 0.0
        %1902 = vmatmul.mubr.f32.gmra.mrb[0].mxu0 %v1576
        %v1903 = vpop.f32.mrb[0].mxu0
        %v1904 = vadd.f32 %v1468, %v1903
        %v1905 = vpop.f32.mrb[0].mxu0
        %1906 = vmatprep.mubr.f32.mxu0 0.0
        %1907 = vmatmul.mubr.f32.gmra.mrb[0].mxu0 %v1579
        %v1908 = vpop.f32.mrb[0].mxu0
        %v1909 = vadd.f32 %v1468, %v1908
        %v1910 = vpop.f32.mrb[0].mxu0
        %1911 = vmatprep.mubr.f32.mxu0 0.0
        %1912 = vmatmul.mubr.f32.gmra.mrb[0].mxu0 %v1582
        %v1913 = vpop.f32.mrb[0].mxu0
        %v1914 = vadd.f32 %v1468, %v1913
        %v1915 = vpop.f32.mrb[0].mxu0
        %1916 = vmatprep.mubr.f32.mxu0 0.0
        %1917 = vmatmul.mubr.f32.gmra.mrb[0].mxu0 %v1585
        %v1918 = vpop.f32.mrb[0].mxu0
        %v1919 = vadd.f32 %v1468, %v1918
        %v1920 = vpop.f32.mrb[0].mxu0
        %1921 = vmatprep.mubr.f32.mxu0 0.0
        %1922 = vmatmul.mubr.f32.gmra.mrb[0].mxu0 %v1588
        %v1923 = vpop.f32.mrb[0].mxu0
        %v1924 = vadd.f32 %v1468, %v1923
        %v1925 = vpop.f32.mrb[0].mxu0
        %1926 = vmatprep.mubr.f32.mxu0 0.0
        %1927 = vmatmul.mubr.f32.gmra.mrb[0].mxu0 %v1591
        %v1928 = vpop.f32.mrb[0].mxu0
        %v1929 = vadd.f32 %v1468, %v1928
        %v1930 = vpop.f32.mrb[0].mxu0
        %1931 = vmatprep.mubr.f32.mxu0 0.0
        %1932 = vmatmul.mubr.f32.gmra.mrb[0].mxu0 %v1594
        %v1933 = vpop.f32.mrb[0].mxu0
        %v1934 = vadd.f32 %v1468, %v1933
        %v1935 = vpop.f32.mrb[0].mxu0
        %1936 = vmatprep.mubr.f32.mxu0 0.0
        %1937 = vmatmul.mubr.f32.gmra.mrb[0].mxu0 %v1597
        %v1938 = vpop.f32.mrb[0].mxu0
        %v1939 = vadd.f32 %v1468, %v1938
        %v1940 = vpop.f32.mrb[0].mxu0
        %1941 = vmatprep.mubr.f32.mxu0 0.0
        %1942 = vmatmul.mubr.f32.gmra.mrb[0].mxu0 %v1600
        %v1943 = vpop.f32.mrb[0].mxu0
        %v1944 = vadd.f32 %v1468, %v1943
        %v1945 = vpop.f32.mrb[0].mxu0
        %1946 = vmatprep.mubr.f32.mxu0 0.0
        %1947 = vmatmul.mubr.f32.gmra.mrb[0].mxu0 %v1603
        %v1948 = vpop.f32.mrb[0].mxu0
        %v1949 = vadd.f32 %v1468, %v1948
        %v1950 = vpop.f32.mrb[0].mxu0
        %1951 = vmatprep.mubr.f32.mxu0 0.0
        %1952 = vmatmul.mubr.f32.gmra.mrb[0].mxu0 %v1606
        %v1953 = vpop.f32.mrb[0].mxu0
        %v1954 = vadd.f32 %v1468, %v1953
        %v1955 = vpop.f32.mrb[0].mxu0
        %1956 = vmatprep.mubr.f32.mxu0 0.0
        %1957 = vmatmul.mubr.f32.gmra.mrb[0].mxu0 %v1609
        %v1958 = vpop.f32.mrb[0].mxu0
        %v1959 = vadd.f32 %v1468, %v1958
        %v1960 = vpop.f32.mrb[0].mxu0
        %1961 = vmatprep.mubr.f32.mxu0 0.0
        %1962 = vmatmul.mubr.f32.gmra.mrb[0].mxu0 %v1612
        %v1963 = vpop.f32.mrb[0].mxu0
        %v1964 = vadd.f32 %v1468, %v1963
        %v1965 = vpop.f32.mrb[0].mxu0
        %1966 = vmatprep.mubr.f32.mxu0 0.0
        %1967 = vmatmul.mubr.f32.gmra.mrb[0].mxu0 %v1615
        %v1968 = vpop.f32.mrb[0].mxu0
        %v1969 = vadd.f32 %v1468, %v1968
        %v1970 = vpop.f32.mrb[0].mxu0
        %1971 = vmatprep.mubr.f32.mxu0 0.0
        %1972 = vmatmul.mubr.f32.gmra.mrb[0].mxu0 %v1618
        %v1973 = vpop.f32.mrb[0].mxu0
        %v1974 = vadd.f32 %v1468, %v1973
        %v1975 = vpop.f32.mrb[0].mxu0
        %1976 = vmatprep.mubr.f32.mxu0 0.0
        %1977 = vmatmul.mubr.f32.gmra.mrb[0].mxu0 %v1621
        %v1978 = vpop.f32.mrb[0].mxu0
        %v1979 = vadd.f32 %v1468, %v1978
        %v1980 = vpop.f32.mrb[0].mxu0
        %1981 = vmatprep.mubr.f32.mxu0 0.0
        %1982 = vmatmul.mubr.f32.gmra.mrb[0].mxu0 %v1624
        %v1983 = vpop.f32.mrb[0].mxu0
        %v1984 = vadd.f32 %v1468, %v1983
        %v1985 = vpop.f32.mrb[0].mxu0
        %1986 = vmatprep.mubr.f32.mxu0 0.0
        %1987 = vmatmul.mubr.f32.gmra.mrb[0].mxu0 %v1627
        %v1988 = vpop.f32.mrb[0].mxu0
        %v1989 = vadd.f32 %v1468, %v1988
        %v1990 = vpop.f32.mrb[0].mxu0
        %1991 = vmatprep.mubr.f32.mxu0 0.0
        %1992 = vmatmul.mubr.f32.gmra.mrb[0].mxu0 %v1630
        %v1993 = vpop.f32.mrb[0].mxu0
        %v1994 = vadd.f32 %v1468, %v1993
        %v1995 = vpop.f32.mrb[0].mxu0
        %1996 = vmatprep.mubr.f32.mxu0 0.0
        %1997 = vmatmul.mubr.f32.gmra.mrb[0].mxu0 %v1633
        %v1998 = vpop.f32.mrb[0].mxu0
        %v1999 = vadd.f32 %v1468, %v1998
        %v2000 = vpop.f32.mrb[0].mxu0
        %2001 = vmatprep.mubr.f32.mxu0 0.0
        %2002 = vmatmul.mubr.f32.gmra.mrb[0].mxu0 %v1636
        %v2003 = vpop.f32.mrb[0].mxu0
        %v2004 = vadd.f32 %v1468, %v2003
        %v2005 = vpop.f32.mrb[0].mxu0
        %2006 = vmatprep.mubr.f32.mxu0 0.0
        %2007 = vmatmul.mubr.f32.gmra.mrb[0].mxu0 %v1639
        %v2008 = vpop.f32.mrb[0].mxu0
        %v2009 = vadd.f32 %v1468, %v2008
        %v2010 = vpop.f32.mrb[0].mxu0
        %2011 = vmatprep.mubr.f32.mxu0 0.0
        %2012 = vmatmul.mubr.f32.gmra.mrb[0].mxu0 %v1642
        %v2013 = vpop.f32.mrb[0].mxu0
        %v2014 = vadd.f32 %v1468, %v2013
        %v2015 = vpop.f32.mrb[0].mxu0
        %2016 = vmatprep.mubr.f32.mxu0 0.0
        %2017 = vmatmul.mubr.f32.gmra.mrb[0].mxu0 %v1645
        %v2018 = vpop.f32.mrb[0].mxu0
        %v2019 = vadd.f32 %v1468, %v2018
        %v2020 = vpop.f32.mrb[0].mxu0
        %2021 = vmatprep.mubr.f32.mxu0 0.0
        %2022 = vmatmul.mubr.f32.gmra.mrb[0].mxu0 %v1648
        %v2023 = vpop.f32.mrb[0].mxu0
        %v2024 = vadd.f32 %v1468, %v2023
        %v2025 = vpop.f32.mrb[0].mxu0
        %2026 = vmatprep.mubr.f32.mxu0 0.0
        %2027 = vmatmul.mubr.f32.gmra.mrb[0].mxu0 %v1651
        %v2028 = vpop.f32.mrb[0].mxu0
        %v2029 = vadd.f32 %v1468, %v2028
        %v2030 = vpop.f32.mrb[0].mxu0
        %2031 = vmatprep.mubr.f32.mxu0 0.0
        %2032 = vmatmul.mubr.f32.gmra.mrb[0].mxu0 %v1654
        %v2033 = vpop.f32.mrb[0].mxu0
        %v2034 = vadd.f32 %v1468, %v2033
        %v2035 = vpop.f32.mrb[0].mxu0
        %2036 = vmatprep.mubr.f32.mxu0 0.0
        %2037 = vmatmul.mubr.f32.gmra.mrb[0].mxu0 %v1657
        %v2038 = vpop.f32.mrb[0].mxu0
        %v2039 = vadd.f32 %v1468, %v2038
        %v2040 = vpop.f32.mrb[0].mxu0
        %2041 = vmatprep.mubr.f32.mxu0 0.0
        %2042 = vmatmul.mubr.f32.gmra.mrb[0].mxu0 %v1660
        %v2043 = vpop.f32.mrb[0].mxu0
        %v2044 = vadd.f32 %v1468, %v2043
        %v2045 = vpop.f32.mrb[0].mxu0
        %2046 = vdwg.mxu0
        %v2047 = vmax.f32 %v1729, 0.0
        %v2048 = vmax.f32 %v1734, 0.0
        %v2049 = vmax.f32 %v1739, 0.0
        %v2050 = vmax.f32 %v1744, 0.0
        %v2051 = vmax.f32 %v1749, 0.0
        %v2052 = vmax.f32 %v1754, 0.0
        %v2053 = vmax.f32 %v1759, 0.0
        %v2054 = vmax.f32 %v1764, 0.0
        %v2055 = vmax.f32 %v1769, 0.0
        %v2056 = vmax.f32 %v1774, 0.0
        %v2057 = vmax.f32 %v1779, 0.0
        %v2058 = vmax.f32 %v1784, 0.0
        %v2059 = vmax.f32 %v1789, 0.0
        %v2060 = vmax.f32 %v1794, 0.0
        %v2061 = vmax.f32 %v1799, 0.0
        %v2062 = vmax.f32 %v1804, 0.0
        %v2063 = vmax.f32 %v1809, 0.0
        %v2064 = vmax.f32 %v1814, 0.0
        %v2065 = vmax.f32 %v1819, 0.0
        %v2066 = vmax.f32 %v1824, 0.0
        %v2067 = vmax.f32 %v1829, 0.0
        %v2068 = vmax.f32 %v1834, 0.0
        %v2069 = vmax.f32 %v1839, 0.0
        %v2070 = vmax.f32 %v1844, 0.0
        %v2071 = vmax.f32 %v1849, 0.0
        %v2072 = vmax.f32 %v1854, 0.0
        %v2073 = vmax.f32 %v1859, 0.0
        %v2074 = vmax.f32 %v1864, 0.0
        %v2075 = vmax.f32 %v1869, 0.0
        %v2076 = vmax.f32 %v1874, 0.0
        %v2077 = vmax.f32 %v1879, 0.0
        %v2078 = vmax.f32 %v1884, 0.0
        %v2079 = vmax.f32 %v1889, 0.0
        %v2080 = vmax.f32 %v1894, 0.0
        %v2081 = vmax.f32 %v1899, 0.0
        %v2082 = vmax.f32 %v1904, 0.0
        %v2083 = vmax.f32 %v1909, 0.0
        %v2084 = vmax.f32 %v1914, 0.0
        %v2085 = vmax.f32 %v1919, 0.0
        %v2086 = vmax.f32 %v1924, 0.0
        %v2087 = vmax.f32 %v1929, 0.0
        %v2088 = vmax.f32 %v1934, 0.0
        %v2089 = vmax.f32 %v1939, 0.0
        %v2090 = vmax.f32 %v1944, 0.0
        %v2091 = vmax.f32 %v1949, 0.0
        %v2092 = vmax.f32 %v1954, 0.0
        %v2093 = vmax.f32 %v1959, 0.0
        %v2094 = vmax.f32 %v1964, 0.0
        %v2095 = vmax.f32 %v1969, 0.0
        %v2096 = vmax.f32 %v1974, 0.0
        %v2097 = vmax.f32 %v1979, 0.0
        %v2098 = vmax.f32 %v1984, 0.0
        %v2099 = vmax.f32 %v1989, 0.0
        %v2100 = vmax.f32 %v1994, 0.0
        %v2101 = vmax.f32 %v1999, 0.0
        %v2102 = vmax.f32 %v2004, 0.0
        %v2103 = vmax.f32 %v2009, 0.0
        %v2104 = vmax.f32 %v2014, 0.0
        %v2105 = vmax.f32 %v2019, 0.0
        %v2106 = vmax.f32 %v2024, 0.0
        %v2107 = vmax.f32 %v2029, 0.0
        %v2108 = vmax.f32 %v2034, 0.0
        %v2109 = vmax.f32 %v2039, 0.0
        %v2110 = vmax.f32 %v2044, 0.0
        %v2111 = vlaneseq
        %v2112 = vshrl.u32 %v2111, 7
        %v2113 = vsub.s32 0, %v2112
        %v2114 = vrot.slane %v163, %v2113
        %v2116 = vsel %vm1469, %v2047, 0
        %v2119 = vsel %vm1469, %v2048, 0
        %v2122 = vsel %vm1469, %v2049, 0
        %v2125 = vsel %vm1469, %v2050, 0
        %v2128 = vsel %vm1469, %v2051, 0
        %v2131 = vsel %vm1469, %v2052, 0
        %v2134 = vsel %vm1469, %v2053, 0
        %v2137 = vsel %vm1469, %v2054, 0
        %v2140 = vsel %vm1469, %v2055, 0
        %v2143 = vsel %vm1469, %v2056, 0
        %v2146 = vsel %vm1469, %v2057, 0
        %v2149 = vsel %vm1469, %v2058, 0
        %v2152 = vsel %vm1469, %v2059, 0
        %v2155 = vsel %vm1469, %v2060, 0
        %v2158 = vsel %vm1469, %v2061, 0
        %v2161 = vsel %vm1469, %v2062, 0
        %v2164 = vsel %vm1469, %v2063, 0
        %v2167 = vsel %vm1469, %v2064, 0
        %v2170 = vsel %vm1469, %v2065, 0
        %v2173 = vsel %vm1469, %v2066, 0
        %v2176 = vsel %vm1469, %v2067, 0
        %v2179 = vsel %vm1469, %v2068, 0
        %v2182 = vsel %vm1469, %v2069, 0
        %v2185 = vsel %vm1469, %v2070, 0
        %v2188 = vsel %vm1469, %v2071, 0
        %v2191 = vsel %vm1469, %v2072, 0
        %v2194 = vsel %vm1469, %v2073, 0
        %v2197 = vsel %vm1469, %v2074, 0
        %v2200 = vsel %vm1469, %v2075, 0
        %v2203 = vsel %vm1469, %v2076, 0
        %v2206 = vsel %vm1469, %v2077, 0
        %v2209 = vsel %vm1469, %v2078, 0
        %v2212 = vsel %vm1469, %v2079, 0
        %v2215 = vsel %vm1469, %v2080, 0
        %v2218 = vsel %vm1469, %v2081, 0
        %v2221 = vsel %vm1469, %v2082, 0
        %v2224 = vsel %vm1469, %v2083, 0
        %v2227 = vsel %vm1469, %v2084, 0
        %v2230 = vsel %vm1469, %v2085, 0
        %v2233 = vsel %vm1469, %v2086, 0
        %v2236 = vsel %vm1469, %v2087, 0
        %v2239 = vsel %vm1469, %v2088, 0
        %v2242 = vsel %vm1469, %v2089, 0
        %v2245 = vsel %vm1469, %v2090, 0
        %v2248 = vsel %vm1469, %v2091, 0
        %v2251 = vsel %vm1469, %v2092, 0
        %v2254 = vsel %vm1469, %v2093, 0
        %v2257 = vsel %vm1469, %v2094, 0
        %v2260 = vsel %vm1469, %v2095, 0
        %v2263 = vsel %vm1469, %v2096, 0
        %v2266 = vsel %vm1469, %v2097, 0
        %v2269 = vsel %vm1469, %v2098, 0
        %v2272 = vsel %vm1469, %v2099, 0
        %v2275 = vsel %vm1469, %v2100, 0
        %v2278 = vsel %vm1469, %v2101, 0
        %v2281 = vsel %vm1469, %v2102, 0
        %v2284 = vsel %vm1469, %v2103, 0
        %v2287 = vsel %vm1469, %v2104, 0
        %v2290 = vsel %vm1469, %v2105, 0
        %v2293 = vsel %vm1469, %v2106, 0
        %v2296 = vsel %vm1469, %v2107, 0
        %v2299 = vsel %vm1469, %v2108, 0
        %v2302 = vsel %vm1469, %v2109, 0
        %v2305 = vsel %vm1469, %v2110, 0
        %2307 = vmatprep.subr.mxu0 0.0
        %2308 = vmatpush1.msra.mxu0 %v153
        %2309 = vmatprep.subr.mxu0 0.0
        %2310 = vmatpush1.msra.mxu0 %v154
        %2311 = vmatprep.subr.mxu0 0.0
        %2312 = vmatpush1.msra.mxu0 %v155
        %2313 = vmatprep.subr.mxu0 0.0
        %2314 = vmatpush1.msra.mxu0 %v156
        %2315 = vmatprep.subr.mxu0 0.0
        %2316 = vmatpush1.msra.mxu0 0.0
        %2317 = vmatprep.subr.mxu0 0.0
        %2318 = vmatpush1.msra.mxu0 0.0
        %2319 = vmatprep.subr.mxu0 0.0
        %2320 = vmatpush1.msra.mxu0 0.0
        %2321 = vmatprep.subr.mxu0 0.0
        %2322 = vmatpush1.msra.mxu0 0.0
        %2323 = vmatprep.subr.mxu0 0.0
        %2324 = vmatpush1.msra.mxu0 0.0
        %2325 = vmatprep.subr.mxu0 0.0
        %2326 = vmatpush1.msra.mxu0 0.0
        %2327 = vmatprep.subr.mxu0 0.0
        %2328 = vmatpush1.msra.mxu0 0.0
        %2329 = vmatprep.subr.mxu0 0.0
        %2330 = vmatpush1.msra.mxu0 0.0
        %2331 = vmatprep.subr.mxu0 0.0
        %2332 = vmatpush1.msra.mxu0 0.0
        %2333 = vmatprep.subr.mxu0 0.0
        %2334 = vmatpush1.msra.mxu0 0.0
        %2335 = vmatprep.subr.mxu0 0.0
        %2336 = vmatpush1.msra.mxu0 0.0
        %2337 = vmatprep.subr.mxu0 0.0
        %2338 = vmatpush1.msra.mxu0 0.0
        %2339 = vmatprep.subr.mxu0 0.0
        %2340 = vmatpush1.msra.mxu0 0.0
        %2341 = vmatprep.subr.mxu0 0.0
        %2342 = vmatpush1.msra.mxu0 0.0
        %2343 = vmatprep.subr.mxu0 0.0
        %2344 = vmatpush1.msra.mxu0 0.0
        %2345 = vmatprep.subr.mxu0 0.0
        %2346 = vmatpush1.msra.mxu0 0.0
        %2347 = vmatprep.subr.mxu0 0.0
        %2348 = vmatpush1.msra.mxu0 0.0
        %2349 = vmatprep.subr.mxu0 0.0
        %2350 = vmatpush1.msra.mxu0 0.0
        %2351 = vmatprep.subr.mxu0 0.0
        %2352 = vmatpush1.msra.mxu0 0.0
        %2353 = vmatprep.subr.mxu0 0.0
        %2354 = vmatpush1.msra.mxu0 0.0
        %2355 = vmatprep.subr.mxu0 0.0
        %2356 = vmatpush1.msra.mxu0 0.0
        %2357 = vmatprep.subr.mxu0 0.0
        %2358 = vmatpush1.msra.mxu0 0.0
        %2359 = vmatprep.subr.mxu0 0.0
        %2360 = vmatpush1.msra.mxu0 0.0
        %2361 = vmatprep.subr.mxu0 0.0
        %2362 = vmatpush1.msra.mxu0 0.0
        %2363 = vmatprep.subr.mxu0 0.0
        %2364 = vmatpush1.msra.mxu0 0.0
        %2365 = vmatprep.subr.mxu0 0.0
        %2366 = vmatpush1.msra.mxu0 0.0
        %2367 = vmatprep.subr.mxu0 0.0
        %2368 = vmatpush1.msra.mxu0 0.0
        %2369 = vmatprep.subr.mxu0 0.0
        %2370 = vmatpush1.msra.mxu0 0.0
        %2371 = vmatprep.mubr.f32.mxu0 0.0
        %2372 = vmatmul.mubr.f32.gmra.mrb[0].mxu0 %v2116
        %v2373 = vpop.f32.mrb[0].mxu0
        %v2374 = vadd.f32 %v2114, %v2373
        %v2375 = vpop.f32.mrb[0].mxu0
        %2376 = vmatprep.mubr.f32.mxu0 0.0
        %2377 = vmatmul.mubr.f32.gmra.mrb[0].mxu0 %v2119
        %v2378 = vpop.f32.mrb[0].mxu0
        %v2379 = vadd.f32 %v2114, %v2378
        %v2380 = vpop.f32.mrb[0].mxu0
        %2381 = vmatprep.mubr.f32.mxu0 0.0
        %2382 = vmatmul.mubr.f32.gmra.mrb[0].mxu0 %v2122
        %v2383 = vpop.f32.mrb[0].mxu0
        %v2384 = vadd.f32 %v2114, %v2383
        %v2385 = vpop.f32.mrb[0].mxu0
        %2386 = vmatprep.mubr.f32.mxu0 0.0
        %2387 = vmatmul.mubr.f32.gmra.mrb[0].mxu0 %v2125
        %v2388 = vpop.f32.mrb[0].mxu0
        %v2389 = vadd.f32 %v2114, %v2388
        %v2390 = vpop.f32.mrb[0].mxu0
        %2391 = vmatprep.mubr.f32.mxu0 0.0
        %2392 = vmatmul.mubr.f32.gmra.mrb[0].mxu0 %v2128
        %v2393 = vpop.f32.mrb[0].mxu0
        %v2394 = vadd.f32 %v2114, %v2393
        %v2395 = vpop.f32.mrb[0].mxu0
        %2396 = vmatprep.mubr.f32.mxu0 0.0
        %2397 = vmatmul.mubr.f32.gmra.mrb[0].mxu0 %v2131
        %v2398 = vpop.f32.mrb[0].mxu0
        %v2399 = vadd.f32 %v2114, %v2398
        %v2400 = vpop.f32.mrb[0].mxu0
        %2401 = vmatprep.mubr.f32.mxu0 0.0
        %2402 = vmatmul.mubr.f32.gmra.mrb[0].mxu0 %v2134
        %v2403 = vpop.f32.mrb[0].mxu0
        %v2404 = vadd.f32 %v2114, %v2403
        %v2405 = vpop.f32.mrb[0].mxu0
        %2406 = vmatprep.mubr.f32.mxu0 0.0
        %2407 = vmatmul.mubr.f32.gmra.mrb[0].mxu0 %v2137
        %v2408 = vpop.f32.mrb[0].mxu0
        %v2409 = vadd.f32 %v2114, %v2408
        %v2410 = vpop.f32.mrb[0].mxu0
        %2411 = vmatprep.mubr.f32.mxu0 0.0
        %2412 = vmatmul.mubr.f32.gmra.mrb[0].mxu0 %v2140
        %v2413 = vpop.f32.mrb[0].mxu0
        %v2414 = vadd.f32 %v2114, %v2413
        %v2415 = vpop.f32.mrb[0].mxu0
        %2416 = vmatprep.mubr.f32.mxu0 0.0
        %2417 = vmatmul.mubr.f32.gmra.mrb[0].mxu0 %v2143
        %v2418 = vpop.f32.mrb[0].mxu0
        %v2419 = vadd.f32 %v2114, %v2418
        %v2420 = vpop.f32.mrb[0].mxu0
        %2421 = vmatprep.mubr.f32.mxu0 0.0
        %2422 = vmatmul.mubr.f32.gmra.mrb[0].mxu0 %v2146
        %v2423 = vpop.f32.mrb[0].mxu0
        %v2424 = vadd.f32 %v2114, %v2423
        %v2425 = vpop.f32.mrb[0].mxu0
        %2426 = vmatprep.mubr.f32.mxu0 0.0
        %2427 = vmatmul.mubr.f32.gmra.mrb[0].mxu0 %v2149
        %v2428 = vpop.f32.mrb[0].mxu0
        %v2429 = vadd.f32 %v2114, %v2428
        %v2430 = vpop.f32.mrb[0].mxu0
        %2431 = vmatprep.mubr.f32.mxu0 0.0
        %2432 = vmatmul.mubr.f32.gmra.mrb[0].mxu0 %v2152
        %v2433 = vpop.f32.mrb[0].mxu0
        %v2434 = vadd.f32 %v2114, %v2433
        %v2435 = vpop.f32.mrb[0].mxu0
        %2436 = vmatprep.mubr.f32.mxu0 0.0
        %2437 = vmatmul.mubr.f32.gmra.mrb[0].mxu0 %v2155
        %v2438 = vpop.f32.mrb[0].mxu0
        %v2439 = vadd.f32 %v2114, %v2438
        %v2440 = vpop.f32.mrb[0].mxu0
        %2441 = vmatprep.mubr.f32.mxu0 0.0
        %2442 = vmatmul.mubr.f32.gmra.mrb[0].mxu0 %v2158
        %v2443 = vpop.f32.mrb[0].mxu0
        %v2444 = vadd.f32 %v2114, %v2443
        %v2445 = vpop.f32.mrb[0].mxu0
        %2446 = vmatprep.mubr.f32.mxu0 0.0
        %2447 = vmatmul.mubr.f32.gmra.mrb[0].mxu0 %v2161
        %v2448 = vpop.f32.mrb[0].mxu0
        %v2449 = vadd.f32 %v2114, %v2448
        %v2450 = vpop.f32.mrb[0].mxu0
        %2451 = vmatprep.mubr.f32.mxu0 0.0
        %2452 = vmatmul.mubr.f32.gmra.mrb[0].mxu0 %v2164
        %v2453 = vpop.f32.mrb[0].mxu0
        %v2454 = vadd.f32 %v2114, %v2453
        %v2455 = vpop.f32.mrb[0].mxu0
        %2456 = vmatprep.mubr.f32.mxu0 0.0
        %2457 = vmatmul.mubr.f32.gmra.mrb[0].mxu0 %v2167
        %v2458 = vpop.f32.mrb[0].mxu0
        %v2459 = vadd.f32 %v2114, %v2458
        %v2460 = vpop.f32.mrb[0].mxu0
        %2461 = vmatprep.mubr.f32.mxu0 0.0
        %2462 = vmatmul.mubr.f32.gmra.mrb[0].mxu0 %v2170
        %v2463 = vpop.f32.mrb[0].mxu0
        %v2464 = vadd.f32 %v2114, %v2463
        %v2465 = vpop.f32.mrb[0].mxu0
        %2466 = vmatprep.mubr.f32.mxu0 0.0
        %2467 = vmatmul.mubr.f32.gmra.mrb[0].mxu0 %v2173
        %v2468 = vpop.f32.mrb[0].mxu0
        %v2469 = vadd.f32 %v2114, %v2468
        %v2470 = vpop.f32.mrb[0].mxu0
        %2471 = vmatprep.mubr.f32.mxu0 0.0
        %2472 = vmatmul.mubr.f32.gmra.mrb[0].mxu0 %v2176
        %v2473 = vpop.f32.mrb[0].mxu0
        %v2474 = vadd.f32 %v2114, %v2473
        %v2475 = vpop.f32.mrb[0].mxu0
        %2476 = vmatprep.mubr.f32.mxu0 0.0
        %2477 = vmatmul.mubr.f32.gmra.mrb[0].mxu0 %v2179
        %v2478 = vpop.f32.mrb[0].mxu0
        %v2479 = vadd.f32 %v2114, %v2478
        %v2480 = vpop.f32.mrb[0].mxu0
        %2481 = vmatprep.mubr.f32.mxu0 0.0
        %2482 = vmatmul.mubr.f32.gmra.mrb[0].mxu0 %v2182
        %v2483 = vpop.f32.mrb[0].mxu0
        %v2484 = vadd.f32 %v2114, %v2483
        %v2485 = vpop.f32.mrb[0].mxu0
        %2486 = vmatprep.mubr.f32.mxu0 0.0
        %2487 = vmatmul.mubr.f32.gmra.mrb[0].mxu0 %v2185
        %v2488 = vpop.f32.mrb[0].mxu0
        %v2489 = vadd.f32 %v2114, %v2488
        %v2490 = vpop.f32.mrb[0].mxu0
        %2491 = vmatprep.mubr.f32.mxu0 0.0
        %2492 = vmatmul.mubr.f32.gmra.mrb[0].mxu0 %v2188
        %v2493 = vpop.f32.mrb[0].mxu0
        %v2494 = vadd.f32 %v2114, %v2493
        %v2495 = vpop.f32.mrb[0].mxu0
        %2496 = vmatprep.mubr.f32.mxu0 0.0
        %2497 = vmatmul.mubr.f32.gmra.mrb[0].mxu0 %v2191
        %v2498 = vpop.f32.mrb[0].mxu0
        %v2499 = vadd.f32 %v2114, %v2498
        %v2500 = vpop.f32.mrb[0].mxu0
        %2501 = vmatprep.mubr.f32.mxu0 0.0
        %2502 = vmatmul.mubr.f32.gmra.mrb[0].mxu0 %v2194
        %v2503 = vpop.f32.mrb[0].mxu0
        %v2504 = vadd.f32 %v2114, %v2503
        %v2505 = vpop.f32.mrb[0].mxu0
        %2506 = vmatprep.mubr.f32.mxu0 0.0
        %2507 = vmatmul.mubr.f32.gmra.mrb[0].mxu0 %v2197
        %v2508 = vpop.f32.mrb[0].mxu0
        %v2509 = vadd.f32 %v2114, %v2508
        %v2510 = vpop.f32.mrb[0].mxu0
        %2511 = vmatprep.mubr.f32.mxu0 0.0
        %2512 = vmatmul.mubr.f32.gmra.mrb[0].mxu0 %v2200
        %v2513 = vpop.f32.mrb[0].mxu0
        %v2514 = vadd.f32 %v2114, %v2513
        %v2515 = vpop.f32.mrb[0].mxu0
        %2516 = vmatprep.mubr.f32.mxu0 0.0
        %2517 = vmatmul.mubr.f32.gmra.mrb[0].mxu0 %v2203
        %v2518 = vpop.f32.mrb[0].mxu0
        %v2519 = vadd.f32 %v2114, %v2518
        %v2520 = vpop.f32.mrb[0].mxu0
        %2521 = vmatprep.mubr.f32.mxu0 0.0
        %2522 = vmatmul.mubr.f32.gmra.mrb[0].mxu0 %v2206
        %v2523 = vpop.f32.mrb[0].mxu0
        %v2524 = vadd.f32 %v2114, %v2523
        %v2525 = vpop.f32.mrb[0].mxu0
        %2526 = vmatprep.mubr.f32.mxu0 0.0
        %2527 = vmatmul.mubr.f32.gmra.mrb[0].mxu0 %v2209
        %v2528 = vpop.f32.mrb[0].mxu0
        %v2529 = vadd.f32 %v2114, %v2528
        %v2530 = vpop.f32.mrb[0].mxu0
        %2531 = vmatprep.mubr.f32.mxu0 0.0
        %2532 = vmatmul.mubr.f32.gmra.mrb[0].mxu0 %v2212
        %v2533 = vpop.f32.mrb[0].mxu0
        %v2534 = vadd.f32 %v2114, %v2533
        %v2535 = vpop.f32.mrb[0].mxu0
        %2536 = vmatprep.mubr.f32.mxu0 0.0
        %2537 = vmatmul.mubr.f32.gmra.mrb[0].mxu0 %v2215
        %v2538 = vpop.f32.mrb[0].mxu0
        %v2539 = vadd.f32 %v2114, %v2538
        %v2540 = vpop.f32.mrb[0].mxu0
        %2541 = vmatprep.mubr.f32.mxu0 0.0
        %2542 = vmatmul.mubr.f32.gmra.mrb[0].mxu0 %v2218
        %v2543 = vpop.f32.mrb[0].mxu0
        %v2544 = vadd.f32 %v2114, %v2543
        %v2545 = vpop.f32.mrb[0].mxu0
        %2546 = vmatprep.mubr.f32.mxu0 0.0
        %2547 = vmatmul.mubr.f32.gmra.mrb[0].mxu0 %v2221
        %v2548 = vpop.f32.mrb[0].mxu0
        %v2549 = vadd.f32 %v2114, %v2548
        %v2550 = vpop.f32.mrb[0].mxu0
        %2551 = vmatprep.mubr.f32.mxu0 0.0
        %2552 = vmatmul.mubr.f32.gmra.mrb[0].mxu0 %v2224
        %v2553 = vpop.f32.mrb[0].mxu0
        %v2554 = vadd.f32 %v2114, %v2553
        %v2555 = vpop.f32.mrb[0].mxu0
        %2556 = vmatprep.mubr.f32.mxu0 0.0
        %2557 = vmatmul.mubr.f32.gmra.mrb[0].mxu0 %v2227
        %v2558 = vpop.f32.mrb[0].mxu0
        %v2559 = vadd.f32 %v2114, %v2558
        %v2560 = vpop.f32.mrb[0].mxu0
        %2561 = vmatprep.mubr.f32.mxu0 0.0
        %2562 = vmatmul.mubr.f32.gmra.mrb[0].mxu0 %v2230
        %v2563 = vpop.f32.mrb[0].mxu0
        %v2564 = vadd.f32 %v2114, %v2563
        %v2565 = vpop.f32.mrb[0].mxu0
        %2566 = vmatprep.mubr.f32.mxu0 0.0
        %2567 = vmatmul.mubr.f32.gmra.mrb[0].mxu0 %v2233
        %v2568 = vpop.f32.mrb[0].mxu0
        %v2569 = vadd.f32 %v2114, %v2568
        %v2570 = vpop.f32.mrb[0].mxu0
        %2571 = vmatprep.mubr.f32.mxu0 0.0
        %2572 = vmatmul.mubr.f32.gmra.mrb[0].mxu0 %v2236
        %v2573 = vpop.f32.mrb[0].mxu0
        %v2574 = vadd.f32 %v2114, %v2573
        %v2575 = vpop.f32.mrb[0].mxu0
        %2576 = vmatprep.mubr.f32.mxu0 0.0
        %2577 = vmatmul.mubr.f32.gmra.mrb[0].mxu0 %v2239
        %v2578 = vpop.f32.mrb[0].mxu0
        %v2579 = vadd.f32 %v2114, %v2578
        %v2580 = vpop.f32.mrb[0].mxu0
        %2581 = vmatprep.mubr.f32.mxu0 0.0
        %2582 = vmatmul.mubr.f32.gmra.mrb[0].mxu0 %v2242
        %v2583 = vpop.f32.mrb[0].mxu0
        %v2584 = vadd.f32 %v2114, %v2583
        %v2585 = vpop.f32.mrb[0].mxu0
        %2586 = vmatprep.mubr.f32.mxu0 0.0
        %2587 = vmatmul.mubr.f32.gmra.mrb[0].mxu0 %v2245
        %v2588 = vpop.f32.mrb[0].mxu0
        %v2589 = vadd.f32 %v2114, %v2588
        %v2590 = vpop.f32.mrb[0].mxu0
        %2591 = vmatprep.mubr.f32.mxu0 0.0
        %2592 = vmatmul.mubr.f32.gmra.mrb[0].mxu0 %v2248
        %v2593 = vpop.f32.mrb[0].mxu0
        %v2594 = vadd.f32 %v2114, %v2593
        %v2595 = vpop.f32.mrb[0].mxu0
        %2596 = vmatprep.mubr.f32.mxu0 0.0
        %2597 = vmatmul.mubr.f32.gmra.mrb[0].mxu0 %v2251
        %v2598 = vpop.f32.mrb[0].mxu0
        %v2599 = vadd.f32 %v2114, %v2598
        %v2600 = vpop.f32.mrb[0].mxu0
        %2601 = vmatprep.mubr.f32.mxu0 0.0
        %2602 = vmatmul.mubr.f32.gmra.mrb[0].mxu0 %v2254
        %v2603 = vpop.f32.mrb[0].mxu0
        %v2604 = vadd.f32 %v2114, %v2603
        %v2605 = vpop.f32.mrb[0].mxu0
        %2606 = vmatprep.mubr.f32.mxu0 0.0
        %2607 = vmatmul.mubr.f32.gmra.mrb[0].mxu0 %v2257
        %v2608 = vpop.f32.mrb[0].mxu0
        %v2609 = vadd.f32 %v2114, %v2608
        %v2610 = vpop.f32.mrb[0].mxu0
        %2611 = vmatprep.mubr.f32.mxu0 0.0
        %2612 = vmatmul.mubr.f32.gmra.mrb[0].mxu0 %v2260
        %v2613 = vpop.f32.mrb[0].mxu0
        %v2614 = vadd.f32 %v2114, %v2613
        %v2615 = vpop.f32.mrb[0].mxu0
        %2616 = vmatprep.mubr.f32.mxu0 0.0
        %2617 = vmatmul.mubr.f32.gmra.mrb[0].mxu0 %v2263
        %v2618 = vpop.f32.mrb[0].mxu0
        %v2619 = vadd.f32 %v2114, %v2618
        %v2620 = vpop.f32.mrb[0].mxu0
        %2621 = vmatprep.mubr.f32.mxu0 0.0
        %2622 = vmatmul.mubr.f32.gmra.mrb[0].mxu0 %v2266
        %v2623 = vpop.f32.mrb[0].mxu0
        %v2624 = vadd.f32 %v2114, %v2623
        %v2625 = vpop.f32.mrb[0].mxu0
        %2626 = vmatprep.mubr.f32.mxu0 0.0
        %2627 = vmatmul.mubr.f32.gmra.mrb[0].mxu0 %v2269
        %v2628 = vpop.f32.mrb[0].mxu0
        %v2629 = vadd.f32 %v2114, %v2628
        %v2630 = vpop.f32.mrb[0].mxu0
        %2631 = vmatprep.mubr.f32.mxu0 0.0
        %2632 = vmatmul.mubr.f32.gmra.mrb[0].mxu0 %v2272
        %v2633 = vpop.f32.mrb[0].mxu0
        %v2634 = vadd.f32 %v2114, %v2633
        %v2635 = vpop.f32.mrb[0].mxu0
        %2636 = vmatprep.mubr.f32.mxu0 0.0
        %2637 = vmatmul.mubr.f32.gmra.mrb[0].mxu0 %v2275
        %v2638 = vpop.f32.mrb[0].mxu0
        %v2639 = vadd.f32 %v2114, %v2638
        %v2640 = vpop.f32.mrb[0].mxu0
        %2641 = vmatprep.mubr.f32.mxu0 0.0
        %2642 = vmatmul.mubr.f32.gmra.mrb[0].mxu0 %v2278
        %v2643 = vpop.f32.mrb[0].mxu0
        %v2644 = vadd.f32 %v2114, %v2643
        %v2645 = vpop.f32.mrb[0].mxu0
        %2646 = vmatprep.mubr.f32.mxu0 0.0
        %2647 = vmatmul.mubr.f32.gmra.mrb[0].mxu0 %v2281
        %v2648 = vpop.f32.mrb[0].mxu0
        %v2649 = vadd.f32 %v2114, %v2648
        %v2650 = vpop.f32.mrb[0].mxu0
        %2651 = vmatprep.mubr.f32.mxu0 0.0
        %2652 = vmatmul.mubr.f32.gmra.mrb[0].mxu0 %v2284
        %v2653 = vpop.f32.mrb[0].mxu0
        %v2654 = vadd.f32 %v2114, %v2653
        %v2655 = vpop.f32.mrb[0].mxu0
        %2656 = vmatprep.mubr.f32.mxu0 0.0
        %2657 = vmatmul.mubr.f32.gmra.mrb[0].mxu0 %v2287
        %v2658 = vpop.f32.mrb[0].mxu0
        %v2659 = vadd.f32 %v2114, %v2658
        %v2660 = vpop.f32.mrb[0].mxu0
        %2661 = vmatprep.mubr.f32.mxu0 0.0
        %2662 = vmatmul.mubr.f32.gmra.mrb[0].mxu0 %v2290
        %v2663 = vpop.f32.mrb[0].mxu0
        %v2664 = vadd.f32 %v2114, %v2663
        %v2665 = vpop.f32.mrb[0].mxu0
        %2666 = vmatprep.mubr.f32.mxu0 0.0
        %2667 = vmatmul.mubr.f32.gmra.mrb[0].mxu0 %v2293
        %v2668 = vpop.f32.mrb[0].mxu0
        %v2669 = vadd.f32 %v2114, %v2668
        %v2670 = vpop.f32.mrb[0].mxu0
        %2671 = vmatprep.mubr.f32.mxu0 0.0
        %2672 = vmatmul.mubr.f32.gmra.mrb[0].mxu0 %v2296
        %v2673 = vpop.f32.mrb[0].mxu0
        %v2674 = vadd.f32 %v2114, %v2673
        %v2675 = vpop.f32.mrb[0].mxu0
        %2676 = vmatprep.mubr.f32.mxu0 0.0
        %2677 = vmatmul.mubr.f32.gmra.mrb[0].mxu0 %v2299
        %v2678 = vpop.f32.mrb[0].mxu0
        %v2679 = vadd.f32 %v2114, %v2678
        %v2680 = vpop.f32.mrb[0].mxu0
        %2681 = vmatprep.mubr.f32.mxu0 0.0
        %2682 = vmatmul.mubr.f32.gmra.mrb[0].mxu0 %v2302
        %v2683 = vpop.f32.mrb[0].mxu0
        %v2684 = vadd.f32 %v2114, %v2683
        %v2685 = vpop.f32.mrb[0].mxu0
        %2686 = vmatprep.mubr.f32.mxu0 0.0
        %2687 = vmatmul.mubr.f32.gmra.mrb[0].mxu0 %v2305
        %v2688 = vpop.f32.mrb[0].mxu0
        %v2689 = vadd.f32 %v2114, %v2688
        %v2690 = vpop.f32.mrb[0].mxu0
        %2691 = vdwg.mxu0
        %v2692 = vmax.f32 %v2374, 0.0
        %v2693 = vmax.f32 %v2379, 0.0
        %v2694 = vmax.f32 %v2384, 0.0
        %v2695 = vmax.f32 %v2389, 0.0
        %v2696 = vmax.f32 %v2394, 0.0
        %v2697 = vmax.f32 %v2399, 0.0
        %v2698 = vmax.f32 %v2404, 0.0
        %v2699 = vmax.f32 %v2409, 0.0
        %v2700 = vmax.f32 %v2414, 0.0
        %v2701 = vmax.f32 %v2419, 0.0
        %v2702 = vmax.f32 %v2424, 0.0
        %v2703 = vmax.f32 %v2429, 0.0
        %v2704 = vmax.f32 %v2434, 0.0
        %v2705 = vmax.f32 %v2439, 0.0
        %v2706 = vmax.f32 %v2444, 0.0
        %v2707 = vmax.f32 %v2449, 0.0
        %v2708 = vmax.f32 %v2454, 0.0
        %v2709 = vmax.f32 %v2459, 0.0
        %v2710 = vmax.f32 %v2464, 0.0
        %v2711 = vmax.f32 %v2469, 0.0
        %v2712 = vmax.f32 %v2474, 0.0
        %v2713 = vmax.f32 %v2479, 0.0
        %v2714 = vmax.f32 %v2484, 0.0
        %v2715 = vmax.f32 %v2489, 0.0
        %v2716 = vmax.f32 %v2494, 0.0
        %v2717 = vmax.f32 %v2499, 0.0
        %v2718 = vmax.f32 %v2504, 0.0
        %v2719 = vmax.f32 %v2509, 0.0
        %v2720 = vmax.f32 %v2514, 0.0
        %v2721 = vmax.f32 %v2519, 0.0
        %v2722 = vmax.f32 %v2524, 0.0
        %v2723 = vmax.f32 %v2529, 0.0
        %v2724 = vmax.f32 %v2534, 0.0
        %v2725 = vmax.f32 %v2539, 0.0
        %v2726 = vmax.f32 %v2544, 0.0
        %v2727 = vmax.f32 %v2549, 0.0
        %v2728 = vmax.f32 %v2554, 0.0
        %v2729 = vmax.f32 %v2559, 0.0
        %v2730 = vmax.f32 %v2564, 0.0
        %v2731 = vmax.f32 %v2569, 0.0
        %v2732 = vmax.f32 %v2574, 0.0
        %v2733 = vmax.f32 %v2579, 0.0
        %v2734 = vmax.f32 %v2584, 0.0
        %v2735 = vmax.f32 %v2589, 0.0
        %v2736 = vmax.f32 %v2594, 0.0
        %v2737 = vmax.f32 %v2599, 0.0
        %v2738 = vmax.f32 %v2604, 0.0
        %v2739 = vmax.f32 %v2609, 0.0
        %v2740 = vmax.f32 %v2614, 0.0
        %v2741 = vmax.f32 %v2619, 0.0
        %v2742 = vmax.f32 %v2624, 0.0
        %v2743 = vmax.f32 %v2629, 0.0
        %v2744 = vmax.f32 %v2634, 0.0
        %v2745 = vmax.f32 %v2639, 0.0
        %v2746 = vmax.f32 %v2644, 0.0
        %v2747 = vmax.f32 %v2649, 0.0
        %v2748 = vmax.f32 %v2654, 0.0
        %v2749 = vmax.f32 %v2659, 0.0
        %v2750 = vmax.f32 %v2664, 0.0
        %v2751 = vmax.f32 %v2669, 0.0
        %v2752 = vmax.f32 %v2674, 0.0
        %v2753 = vmax.f32 %v2679, 0.0
        %v2754 = vmax.f32 %v2684, 0.0
        %v2755 = vmax.f32 %v2689, 0.0
        %v2756 = vld [vmem:[%s1 + $0x78] sm:$0xff]
        %v2757 = vld [vmem:[%s1 + $0x80] sm:$0xff]
        %2758 = vmatprep.subr.mxu0 0.0
        %2759 = vmatpush1.msra.mxu0 %v2708
        %2760 = vmatprep.subr.mxu0 0.0
        %2761 = vmatpush1.msra.mxu0 %v2709
        %2762 = vmatprep.subr.mxu0 0.0
        %2763 = vmatpush1.msra.mxu0 %v2710
        %2764 = vmatprep.subr.mxu0 0.0
        %2765 = vmatpush1.msra.mxu0 %v2711
        %2766 = vmatprep.subr.mxu0 0.0
        %2767 = vmatpush1.msra.mxu0 %v2712
        %2768 = vmatprep.subr.mxu0 0.0
        %2769 = vmatpush1.msra.mxu0 %v2713
        %2770 = vmatprep.subr.mxu0 0.0
        %2771 = vmatpush1.msra.mxu0 %v2714
        %2772 = vmatprep.subr.mxu0 0.0
        %2773 = vmatpush1.msra.mxu0 %v2715
        %2774 = vmatprep.subr.mxu0 0.0
        %2775 = vmatpush1.msra.mxu0 %v2716
        %2776 = vmatprep.subr.mxu0 0.0
        %2777 = vmatpush1.msra.mxu0 %v2717
        %2778 = vmatprep.subr.mxu0 0.0
        %2779 = vmatpush1.msra.mxu0 %v2718
        %2780 = vmatprep.subr.mxu0 0.0
        %2781 = vmatpush1.msra.mxu0 %v2719
        %2782 = vmatprep.subr.mxu0 0.0
        %2783 = vmatpush1.msra.mxu0 %v2720
        %2784 = vmatprep.subr.mxu0 0.0
        %2785 = vmatpush1.msra.mxu0 %v2721
        %2786 = vmatprep.subr.mxu0 0.0
        %2787 = vmatpush1.msra.mxu0 %v2722
        %2788 = vmatprep.subr.mxu0 0.0
        %2789 = vmatpush1.msra.mxu0 %v2723
        %2790 = vmatprep.subr.mxu0 0.0
        %2791 = vmatpush1.msra.mxu0 0.0
        %2792 = vmatprep.subr.mxu0 0.0
        %2793 = vmatpush1.msra.mxu0 0.0
        %2794 = vmatprep.subr.mxu0 0.0
        %2795 = vmatpush1.msra.mxu0 0.0
        %2796 = vmatprep.subr.mxu0 0.0
        %2797 = vmatpush1.msra.mxu0 0.0
        %2798 = vmatprep.subr.mxu0 0.0
        %2799 = vmatpush1.msra.mxu0 0.0
        %2800 = vmatprep.subr.mxu0 0.0
        %2801 = vmatpush1.msra.mxu0 0.0
        %2802 = vmatprep.subr.mxu0 0.0
        %2803 = vmatpush1.msra.mxu0 0.0
        %2804 = vmatprep.subr.mxu0 0.0
        %2805 = vmatpush1.msra.mxu0 0.0
        %2806 = vmatprep.subr.mxu0 0.0
        %2807 = vmatpush1.msra.mxu0 0.0
        %2808 = vmatprep.subr.mxu0 0.0
        %2809 = vmatpush1.msra.mxu0 0.0
        %2810 = vmatprep.subr.mxu0 0.0
        %2811 = vmatpush1.msra.mxu0 0.0
        %2812 = vmatprep.subr.mxu0 0.0
        %2813 = vmatpush1.msra.mxu0 0.0
        %2814 = vmatprep.subr.mxu0 0.0
        %2815 = vmatpush1.msra.mxu0 0.0
        %2816 = vmatprep.subr.mxu0 0.0
        %2817 = vmatpush1.msra.mxu0 0.0
        %2818 = vmatprep.subr.mxu0 0.0
        %2819 = vmatpush1.msra.mxu0 0.0
        %2820 = vmatprep.subr.mxu0 0.0
        %2821 = vmatpush1.msra.mxu0 0.0
        %2822 = vmatprep.mubr.f32.mxu0 0.0
        %2823 = vmatmul.mubr.f32.gmra.mrb[0].mxu0 %v2757
        %v2824 = vpop.f32.mrb[0].mxu0
        %v2825 = vadd.f32 0.0, %v2824
        %v2826 = vpop.f32.mrb[0].mxu0
        %2827 = vdwg.mxu0
        %2828 = vmatprep.subr.mxu0 0.0
        %2829 = vmatpush1.msra.mxu0 %v2692
        %2830 = vmatprep.subr.mxu0 0.0
        %2831 = vmatpush1.msra.mxu0 %v2693
        %2832 = vmatprep.subr.mxu0 0.0
        %2833 = vmatpush1.msra.mxu0 %v2694
        %2834 = vmatprep.subr.mxu0 0.0
        %2835 = vmatpush1.msra.mxu0 %v2695
        %2836 = vmatprep.subr.mxu0 0.0
        %2837 = vmatpush1.msra.mxu0 %v2696
        %2838 = vmatprep.subr.mxu0 0.0
        %2839 = vmatpush1.msra.mxu0 %v2697
        %2840 = vmatprep.subr.mxu0 0.0
        %2841 = vmatpush1.msra.mxu0 %v2698
        %2842 = vmatprep.subr.mxu0 0.0
        %2843 = vmatpush1.msra.mxu0 %v2699
        %2844 = vmatprep.subr.mxu0 0.0
        %2845 = vmatpush1.msra.mxu0 %v2700
        %2846 = vmatprep.subr.mxu0 0.0
        %2847 = vmatpush1.msra.mxu0 %v2701
        %2848 = vmatprep.subr.mxu0 0.0
        %2849 = vmatpush1.msra.mxu0 %v2702
        %2850 = vmatprep.subr.mxu0 0.0
        %2851 = vmatpush1.msra.mxu0 %v2703
        %2852 = vmatprep.subr.mxu0 0.0
        %2853 = vmatpush1.msra.mxu0 %v2704
        %2854 = vmatprep.subr.mxu0 0.0
        %2855 = vmatpush1.msra.mxu0 %v2705
        %2856 = vmatprep.subr.mxu0 0.0
        %2857 = vmatpush1.msra.mxu0 %v2706
        %2858 = vmatprep.subr.mxu0 0.0
        %2859 = vmatpush1.msra.mxu0 %v2707
        %2860 = vmatprep.subr.mxu0 0.0
        %2861 = vmatpush1.msra.mxu0 0.0
        %2862 = vmatprep.subr.mxu0 0.0
        %2863 = vmatpush1.msra.mxu0 0.0
        %2864 = vmatprep.subr.mxu0 0.0
        %2865 = vmatpush1.msra.mxu0 0.0
        %2866 = vmatprep.subr.mxu0 0.0
        %2867 = vmatpush1.msra.mxu0 0.0
        %2868 = vmatprep.subr.mxu0 0.0
        %2869 = vmatpush1.msra.mxu0 0.0
        %2870 = vmatprep.subr.mxu0 0.0
        %2871 = vmatpush1.msra.mxu0 0.0
        %2872 = vmatprep.subr.mxu0 0.0
        %2873 = vmatpush1.msra.mxu0 0.0
        %2874 = vmatprep.subr.mxu0 0.0
        %2875 = vmatpush1.msra.mxu0 0.0
        %2876 = vmatprep.subr.mxu0 0.0
        %2877 = vmatpush1.msra.mxu0 0.0
        %2878 = vmatprep.subr.mxu0 0.0
        %2879 = vmatpush1.msra.mxu0 0.0
        %2880 = vmatprep.subr.mxu0 0.0
        %2881 = vmatpush1.msra.mxu0 0.0
        %2882 = vmatprep.subr.mxu0 0.0
        %2883 = vmatpush1.msra.mxu0 0.0
        %2884 = vmatprep.subr.mxu0 0.0
        %2885 = vmatpush1.msra.mxu0 0.0
        %2886 = vmatprep.subr.mxu0 0.0
        %2887 = vmatpush1.msra.mxu0 0.0
        %2888 = vmatprep.subr.mxu0 0.0
        %2889 = vmatpush1.msra.mxu0 0.0
        %2890 = vmatprep.subr.mxu0 0.0
        %2891 = vmatpush1.msra.mxu0 0.0
        %2892 = vmatprep.mubr.f32.mxu0 0.0
        %2893 = vmatmul.mubr.f32.gmra.mrb[0].mxu0 %v2756
        %v2894 = vpop.f32.mrb[0].mxu0
        %v2895 = vadd.f32 %v2825, %v2894
        %v2896 = vpop.f32.mrb[0].mxu0
        %2897 = vdwg.mxu0
        %v2898 = vld [vmem:[%s1 + $0x88] sm:$0xff]
        %2899 = vmatprep.subr.mxu0 0.0
        %2900 = vmatpush1.msra.mxu0 %v2724
        %2901 = vmatprep.subr.mxu0 0.0
        %2902 = vmatpush1.msra.mxu0 %v2725
        %2903 = vmatprep.subr.mxu0 0.0
        %2904 = vmatpush1.msra.mxu0 %v2726
        %2905 = vmatprep.subr.mxu0 0.0
        %2906 = vmatpush1.msra.mxu0 %v2727
        %2907 = vmatprep.subr.mxu0 0.0
        %2908 = vmatpush1.msra.mxu0 %v2728
        %2909 = vmatprep.subr.mxu0 0.0
        %2910 = vmatpush1.msra.mxu0 %v2729
        %2911 = vmatprep.subr.mxu0 0.0
        %2912 = vmatpush1.msra.mxu0 %v2730
        %2913 = vmatprep.subr.mxu0 0.0
        %2914 = vmatpush1.msra.mxu0 %v2731
        %2915 = vmatprep.subr.mxu0 0.0
        %2916 = vmatpush1.msra.mxu0 %v2732
        %2917 = vmatprep.subr.mxu0 0.0
        %2918 = vmatpush1.msra.mxu0 %v2733
        %2919 = vmatprep.subr.mxu0 0.0
        %2920 = vmatpush1.msra.mxu0 %v2734
        %2921 = vmatprep.subr.mxu0 0.0
        %2922 = vmatpush1.msra.mxu0 %v2735
        %2923 = vmatprep.subr.mxu0 0.0
        %2924 = vmatpush1.msra.mxu0 %v2736
        %2925 = vmatprep.subr.mxu0 0.0
        %2926 = vmatpush1.msra.mxu0 %v2737
        %2927 = vmatprep.subr.mxu0 0.0
        %2928 = vmatpush1.msra.mxu0 %v2738
        %2929 = vmatprep.subr.mxu0 0.0
        %2930 = vmatpush1.msra.mxu0 %v2739
        %2931 = vmatprep.subr.mxu0 0.0
        %2932 = vmatpush1.msra.mxu0 0.0
        %2933 = vmatprep.subr.mxu0 0.0
        %2934 = vmatpush1.msra.mxu0 0.0
        %2935 = vmatprep.subr.mxu0 0.0
        %2936 = vmatpush1.msra.mxu0 0.0
        %2937 = vmatprep.subr.mxu0 0.0
        %2938 = vmatpush1.msra.mxu0 0.0
        %2939 = vmatprep.subr.mxu0 0.0
        %2940 = vmatpush1.msra.mxu0 0.0
        %2941 = vmatprep.subr.mxu0 0.0
        %2942 = vmatpush1.msra.mxu0 0.0
        %2943 = vmatprep.subr.mxu0 0.0
        %2944 = vmatpush1.msra.mxu0 0.0
        %2945 = vmatprep.subr.mxu0 0.0
        %2946 = vmatpush1.msra.mxu0 0.0
        %2947 = vmatprep.subr.mxu0 0.0
        %2948 = vmatpush1.msra.mxu0 0.0
        %2949 = vmatprep.subr.mxu0 0.0
        %2950 = vmatpush1.msra.mxu0 0.0
        %2951 = vmatprep.subr.mxu0 0.0
        %2952 = vmatpush1.msra.mxu0 0.0
        %2953 = vmatprep.subr.mxu0 0.0
        %2954 = vmatpush1.msra.mxu0 0.0
        %2955 = vmatprep.subr.mxu0 0.0
        %2956 = vmatpush1.msra.mxu0 0.0
        %2957 = vmatprep.subr.mxu0 0.0
        %2958 = vmatpush1.msra.mxu0 0.0
        %2959 = vmatprep.subr.mxu0 0.0
        %2960 = vmatpush1.msra.mxu0 0.0
        %2961 = vmatprep.subr.mxu0 0.0
        %2962 = vmatpush1.msra.mxu0 0.0
        %2963 = vmatprep.mubr.f32.mxu0 0.0
        %2964 = vmatmul.mubr.f32.gmra.mrb[0].mxu0 %v2898
        %v2965 = vpop.f32.mrb[0].mxu0
        %v2966 = vadd.f32 0.0, %v2965
        %v2967 = vpop.f32.mrb[0].mxu0
        %2968 = vdwg.mxu0
        %v2969 = vadd.f32 %v2895, %v2966
        %v2970 = vld [vmem:[%s1 + $0x90] sm:$0xff]
        %2971 = vmatprep.subr.mxu0 0.0
        %2972 = vmatpush1.msra.mxu0 %v2740
        %2973 = vmatprep.subr.mxu0 0.0
        %2974 = vmatpush1.msra.mxu0 %v2741
        %2975 = vmatprep.subr.mxu0 0.0
        %2976 = vmatpush1.msra.mxu0 %v2742
        %2977 = vmatprep.subr.mxu0 0.0
        %2978 = vmatpush1.msra.mxu0 %v2743
        %2979 = vmatprep.subr.mxu0 0.0
        %2980 = vmatpush1.msra.mxu0 %v2744
        %2981 = vmatprep.subr.mxu0 0.0
        %2982 = vmatpush1.msra.mxu0 %v2745
        %2983 = vmatprep.subr.mxu0 0.0
        %2984 = vmatpush1.msra.mxu0 %v2746
        %2985 = vmatprep.subr.mxu0 0.0
        %2986 = vmatpush1.msra.mxu0 %v2747
        %2987 = vmatprep.subr.mxu0 0.0
        %2988 = vmatpush1.msra.mxu0 %v2748
        %2989 = vmatprep.subr.mxu0 0.0
        %2990 = vmatpush1.msra.mxu0 %v2749
        %2991 = vmatprep.subr.mxu0 0.0
        %2992 = vmatpush1.msra.mxu0 %v2750
        %2993 = vmatprep.subr.mxu0 0.0
        %2994 = vmatpush1.msra.mxu0 %v2751
        %2995 = vmatprep.subr.mxu0 0.0
        %2996 = vmatpush1.msra.mxu0 %v2752
        %2997 = vmatprep.subr.mxu0 0.0
        %2998 = vmatpush1.msra.mxu0 %v2753
        %2999 = vmatprep.subr.mxu0 0.0
        %3000 = vmatpush1.msra.mxu0 %v2754
        %3001 = vmatprep.subr.mxu0 0.0
        %3002 = vmatpush1.msra.mxu0 %v2755
        %3003 = vmatprep.subr.mxu0 0.0
        %3004 = vmatpush1.msra.mxu0 0.0
        %3005 = vmatprep.subr.mxu0 0.0
        %3006 = vmatpush1.msra.mxu0 0.0
        %3007 = vmatprep.subr.mxu0 0.0
        %3008 = vmatpush1.msra.mxu0 0.0
        %3009 = vmatprep.subr.mxu0 0.0
        %3010 = vmatpush1.msra.mxu0 0.0
        %3011 = vmatprep.subr.mxu0 0.0
        %3012 = vmatpush1.msra.mxu0 0.0
        %3013 = vmatprep.subr.mxu0 0.0
        %3014 = vmatpush1.msra.mxu0 0.0
        %3015 = vmatprep.subr.mxu0 0.0
        %3016 = vmatpush1.msra.mxu0 0.0
        %3017 = vmatprep.subr.mxu0 0.0
        %3018 = vmatpush1.msra.mxu0 0.0
        %3019 = vmatprep.subr.mxu0 0.0
        %3020 = vmatpush1.msra.mxu0 0.0
        %3021 = vmatprep.subr.mxu0 0.0
        %3022 = vmatpush1.msra.mxu0 0.0
        %3023 = vmatprep.subr.mxu0 0.0
        %3024 = vmatpush1.msra.mxu0 0.0
        %3025 = vmatprep.subr.mxu0 0.0
        %3026 = vmatpush1.msra.mxu0 0.0
        %3027 = vmatprep.subr.mxu0 0.0
        %3028 = vmatpush1.msra.mxu0 0.0
        %3029 = vmatprep.subr.mxu0 0.0
        %3030 = vmatpush1.msra.mxu0 0.0
        %3031 = vmatprep.subr.mxu0 0.0
        %3032 = vmatpush1.msra.mxu0 0.0
        %3033 = vmatprep.subr.mxu0 0.0
        %3034 = vmatpush1.msra.mxu0 0.0
        %3035 = vmatprep.mubr.f32.mxu0 0.0
        %3036 = vmatmul.mubr.f32.gmra.mrb[0].mxu0 %v2970
        %v3037 = vpop.f32.mrb[0].mxu0
        %v3038 = vadd.f32 0.0, %v3037
        %v3039 = vpop.f32.mrb[0].mxu0
        %3040 = vdwg.mxu0
        %v3041 = vadd.f32 %v2969, %v3038
        %v3042 = vlaneseq
        %v3043 = vshrl.u32 %v3042, 7
        %v3044 = vsub.s32 0, %v3043
        %v3045 = vrot.slane %v164, %v3044
        %v3047 = vsel %vm1469, %v3041, 0
        %3049 = vmatprep.subr.mxu0 0.0
        %3050 = vmatpush1.msra.mxu0 %v157
        %3051 = vmatprep.subr.mxu0 0.0
        %3052 = vmatpush1.msra.mxu0 %v158
        %3053 = vmatprep.subr.mxu0 0.0
        %3054 = vmatpush1.msra.mxu0 %v159
        %3055 = vmatprep.subr.mxu0 0.0
        %3056 = vmatpush1.msra.mxu0 %v160
        %3057 = vmatprep.subr.mxu0 0.0
        %3058 = vmatpush1.msra.mxu0 0.0
        %3059 = vmatprep.subr.mxu0 0.0
        %3060 = vmatpush1.msra.mxu0 0.0
        %3061 = vmatprep.subr.mxu0 0.0
        %3062 = vmatpush1.msra.mxu0 0.0
        %3063 = vmatprep.subr.mxu0 0.0
        %3064 = vmatpush1.msra.mxu0 0.0
        %3065 = vmatprep.subr.mxu0 0.0
        %3066 = vmatpush1.msra.mxu0 0.0
        %3067 = vmatprep.subr.mxu0 0.0
        %3068 = vmatpush1.msra.mxu0 0.0
        %3069 = vmatprep.subr.mxu0 0.0
        %3070 = vmatpush1.msra.mxu0 0.0
        %3071 = vmatprep.subr.mxu0 0.0
        %3072 = vmatpush1.msra.mxu0 0.0
        %3073 = vmatprep.subr.mxu0 0.0
        %3074 = vmatpush1.msra.mxu0 0.0
        %3075 = vmatprep.subr.mxu0 0.0
        %3076 = vmatpush1.msra.mxu0 0.0
        %3077 = vmatprep.subr.mxu0 0.0
        %3078 = vmatpush1.msra.mxu0 0.0
        %3079 = vmatprep.subr.mxu0 0.0
        %3080 = vmatpush1.msra.mxu0 0.0
        %3081 = vmatprep.subr.mxu0 0.0
        %3082 = vmatpush1.msra.mxu0 0.0
        %3083 = vmatprep.subr.mxu0 0.0
        %3084 = vmatpush1.msra.mxu0 0.0
        %3085 = vmatprep.subr.mxu0 0.0
        %3086 = vmatpush1.msra.mxu0 0.0
        %3087 = vmatprep.subr.mxu0 0.0
        %3088 = vmatpush1.msra.mxu0 0.0
        %3089 = vmatprep.subr.mxu0 0.0
        %3090 = vmatpush1.msra.mxu0 0.0
        %3091 = vmatprep.subr.mxu0 0.0
        %3092 = vmatpush1.msra.mxu0 0.0
        %3093 = vmatprep.subr.mxu0 0.0
        %3094 = vmatpush1.msra.mxu0 0.0
        %3095 = vmatprep.subr.mxu0 0.0
        %3096 = vmatpush1.msra.mxu0 0.0
        %3097 = vmatprep.subr.mxu0 0.0
        %3098 = vmatpush1.msra.mxu0 0.0
        %3099 = vmatprep.subr.mxu0 0.0
        %3100 = vmatpush1.msra.mxu0 0.0
        %3101 = vmatprep.subr.mxu0 0.0
        %3102 = vmatpush1.msra.mxu0 0.0
        %3103 = vmatprep.subr.mxu0 0.0
        %3104 = vmatpush1.msra.mxu0 0.0
        %3105 = vmatprep.subr.mxu0 0.0
        %3106 = vmatpush1.msra.mxu0 0.0
        %3107 = vmatprep.subr.mxu0 0.0
        %3108 = vmatpush1.msra.mxu0 0.0
        %3109 = vmatprep.subr.mxu0 0.0
        %3110 = vmatpush1.msra.mxu0 0.0
        %3111 = vmatprep.subr.mxu0 0.0
        %3112 = vmatpush1.msra.mxu0 0.0
        %3113 = vmatprep.mubr.f32.mxu0 0.0
        %3114 = vmatmul.mubr.f32.gmra.mrb[0].mxu0 %v3047
        %v3115 = vpop.f32.mrb[0].mxu0
        %v3116 = vadd.f32 %v3045, %v3115
        %v3117 = vpop.f32.mrb[0].mxu0
        %3118 = vdwg.mxu0
        %3119 = vst [vmem:[%s139] sm:$0xff] %v3116
        %s3120 = sand.u32 %s71, 1
        %s3121 = scalar_lea.sflag [#allocation3], %s3120
        %s3122 = sand.u32 %s71, 1
        %s3123 = smul.addr %s3122, 8
        %s3124 = scalar_lea.vmem [#allocation2], %s3123
        // Predicated region
        $region29: #{tpu_custom_call.1} parent=27 // pred_check
          %p3125 = pneg %p81
        $region30: #{tpu_custom_call.1} parent=27 // pred_check_branch
          %3127 = sbr.rel (%p3125) target = $region32
        $region31: #{tpu_custom_call.1} parent=27 // pred_region
          %s3129 = ssub.s32 128, 128
          %3130 = vsyncadd %s3121, %s3129
          %s3131 = smul.addr %s16, 128
          %s3132 = scalar_lea.hbm %s2, %s3131
          %s3134 = sshll.u32 %s3124, 4
          %s3135 = int_to_ptr.vmem [resolvable:$true] %s3134
          %3137 = dma.vmem_to_hbm [thread:$0]  %s3135, 128, %s3132, %s3121
        $region32: #{tpu_custom_call.1} parent=27 // pred_fallthru
          _
      $region28: #{tpu_custom_call.1} parent=5 // pred_fallthru
        _
      %p3138 = scmp.le.s32.totalorder 2, %s11
      // Predicated region
      $region33: #{tpu_custom_call.1} parent=5 // pred_check
        %p3139 = pneg %p3138
      $region34: #{tpu_custom_call.1} parent=5 // pred_check_branch
        %3141 = sbr.rel (%p3139) target = $region36
      $region35: #{tpu_custom_call.1} parent=5 // pred_region
        %s3142 = ssub.s32 %s11, 2
        // Predicated region
        $region37: #{tpu_custom_call.1} parent=35 // pred_check
          %p3143 = pneg %p87
        $region38: #{tpu_custom_call.1} parent=35 // pred_check_branch
          %3145 = sbr.rel (%p3143) target = $region40
        $region39: #{tpu_custom_call.1} parent=35 // pred_region
          %s3146 = sand.u32 %s72, 1
          %s3147 = scalar_lea.sflag [#allocation3], %s3146
          %s3148 = sand.u32 %s72, 1
          %s3149 = smul.addr %s3148, 8
          %s3150 = scalar_lea.vmem [#allocation2], %s3149
          %3151 = dma.done %s3147, 128
        $region40: #{tpu_custom_call.1} parent=35 // pred_fallthru
          _
      $region36: #{tpu_custom_call.1} parent=5 // pred_fallthru
        _
    $region6: #{tpu_custom_call.1} parent=1 // loop_footer
      %s15 = sadd.s32 1, %s11
    $region7: #{tpu_custom_call.1} parent=1 // loop_footer_branch
      %10 = sbr.rel target = $region3
    $region8: #{tpu_custom_call.1} parent=1 // loop_exit
      _
    %3152 = vsyncpa [#allocation3], 1
    %s3153 = scalar_lea.sflag [#allocation3], 1
    %3154 = vsyncpa %s3153, 1

</llo_original>
